<compile_context>
chip_gen: v5e
topology: v5e:2x2
jax: 0.10.0
libtpu: 0.0.40
codegen_flags: <defaults>
</compile_context>

<pallas_src>
import numpy as np
import jax
import jax.numpy as jnp
from jax.experimental import pallas as pl
from jax.experimental.pallas import tpu as pltpu

# ---------------------------------------------------------------------------
# Problem sizes (small but tile-aligned: N and H multiples of (8,128) tiling).
# ---------------------------------------------------------------------------
NODES_PER_GRAPH = 16
GRAPHS_PER_BATCH = 8                     # -> pooled rows fill all 8 sublanes
BATCH = 2
NUM_NODES = NODES_PER_GRAPH * GRAPHS_PER_BATCH   # 128 node rows per batch item
INPUT_DIM = 32
HIDDEN_DIM = 128                         # module default hidden_dim -> lane dense
NUM_CONV_LAYERS = 3
NUM_FC_LAYERS = 2                        # -> 1 hidden fc layer
BN_EPS = 1e-5
NUM_WEIGHT_MATS = 1 + NUM_CONV_LAYERS + 1 + 2    # feat, 3x conv, fc, proj1, proj2

# vec_all row layout (all rows are length-HIDDEN_DIM f32 vectors)
ROW_FEAT_ADD = 0                          # bn_feat shift folded through feat_fc + bias
ROW_FC_ADD = 1                            # fc BN shift folded through fc W + bias
ROW_P1_ADD = 2                            # bn_hidden shift folded through proj W1 + bias
ROW_P2_ADD = 3                            # proj W2 bias
ROW_CBN_S = 4                             # conv BN scales           (NUM_CONV_LAYERS rows)
ROW_CBN_B = ROW_CBN_S + NUM_CONV_LAYERS   # conv BN shifts           (NUM_CONV_LAYERS rows)
ROW_CBIAS = ROW_CBN_B + NUM_CONV_LAYERS   # conv linear biases       (NUM_CONV_LAYERS rows)
NUM_VEC_ROWS = ROW_CBIAS + NUM_CONV_LAYERS


# ---------------------------------------------------------------------------
# Pallas kernel: one super-batch of node rows per grid step.
# ---------------------------------------------------------------------------
def resgcn_kernel(h_ref, adj_ref, pool_ref, w_ref, vec_ref, out_ref):
    bf16 = jnp.bfloat16
    f32 = jnp.float32

    vecs = vec_ref[...]                   # [13, H] f32 resident vector slab
    adj = adj_ref[...]                    # [N, N] bf16 normalized (block-diag) adjacency

    # bn_feat + feat_fc + ReLU (BN scale folded into W_all[0], shift into vecs[0])
    x = jnp.dot(h_ref[...], w_ref[0], preferred_element_type=f32)
    x = jnp.maximum(x + vecs[ROW_FEAT_ADD:ROW_FEAT_ADD + 1, :], 0.0).astype(bf16)

    # GraphConv stack (norm='both', residual=False). Conv BatchNorm applied in-kernel
    # as a broadcast mul-add (cheap VPU work); weights are the raw conv weights.
    for i in range(NUM_CONV_LAYERS):
        s = vecs[ROW_CBN_S + i:ROW_CBN_S + i + 1, :]
        sh = vecs[ROW_CBN_B + i:ROW_CBN_B + i + 1, :]
        bias = vecs[ROW_CBIAS + i:ROW_CBIAS + i + 1, :]
        t = (x * s + sh).astype(bf16)                                       # BN(x)
        agg = jnp.dot(adj, t, preferred_element_type=f32)                   # A_norm @ t
        hb = jnp.dot(agg.astype(bf16), w_ref[1 + i], preferred_element_type=f32)
        x = jnp.maximum(hb + bias, 0.0).astype(bf16)

    # SumPooling as a [G, N] matmul (segment sums per graph)
    g = jnp.dot(pool_ref[...], x, preferred_element_type=f32)               # [G, H] f32

    # fc block: BN(folded into W) -> Linear -> ReLU
    g = jnp.dot(g.astype(bf16), w_ref[1 + NUM_CONV_LAYERS], preferred_element_type=f32)
    g = jnp.maximum(g + vecs[ROW_FC_ADD:ROW_FC_ADD + 1, :], 0.0)

    # bn_hidden folded into proj W1; dropout(p=0) identity; ProjectionHead
    g = jnp.dot(g.astype(bf16), w_ref[2 + NUM_CONV_LAYERS], preferred_element_type=f32)
    g = jnp.maximum(g + vecs[ROW_P1_ADD:ROW_P1_ADD + 1, :], 0.0)
    g = jnp.dot(g.astype(bf16), w_ref[3 + NUM_CONV_LAYERS], preferred_element_type=f32)
    out_ref[...] = (g + vecs[ROW_P2_ADD:ROW_P2_ADD + 1, :]).astype(out_ref.dtype)


def resgcn_forward(h_pad, adj, pool, w_all, vec_all):
    B, N, H = h_pad.shape
    G = pool.shape[0]
    out_shape = jax.ShapeDtypeStruct((B, G, H), jnp.float32)
    return pl.pallas_call(
        resgcn_kernel,
        out_shape=out_shape,
        grid=(B,),
        in_specs=[
            pl.BlockSpec((None, N, H), lambda b: (b, 0, 0)),              # node feats
            pl.BlockSpec((None, N, N), lambda b: (b, 0, 0)),              # normalized adj
            pl.BlockSpec((G, N), lambda b: (0, 0)),                       # pooling matrix (shared)
            pl.BlockSpec(w_all.shape, lambda b: (0, 0, 0)),               # weight slab (resident)
            pl.BlockSpec(vec_all.shape, lambda b: (0, 0)),                # vector slab (resident)
        ],
        out_specs=pl.BlockSpec((None, G, H), lambda b: (b, 0, 0)),
        compiler_params=pltpu.CompilerParams(
            dimension_semantics=("parallel",)),
    )(h_pad, adj, pool, w_all, vec_all)


# ---------------------------------------------------------------------------
# Pure-JAX reference (un-fused, f32) for correctness.
# ---------------------------------------------------------------------------
def resgcn_reference(h, adj, pool, p):
    def one(hb, ab):
        x = hb * p["bnf_s"] + p["bnf_b"]
        x = jax.nn.relu(x @ p["featW"] + p["featb"])
        for i in range(NUM_CONV_LAYERS):
            t = x * p["cbn_s"][i] + p["cbn_b"][i]
            x = jax.nn.relu((ab @ t) @ p["cW"][i] + p["cb"][i])
        g = pool @ x
        g = g * p["fbn_s"] + p["fbn_b"]
        g = jax.nn.relu(g @ p["fW"] + p["fb"])
        g = g * p["bnh_s"] + p["bnh_b"]
        g = jax.nn.relu(g @ p["pW1"] + p["pb1"])
        return g @ p["pW2"] + p["pb2"]
    return jax.vmap(one)(h, adj)


# ---------------------------------------------------------------------------
# Deterministic setup: params, BN folding into slabs, graphs/pooling matrices.
# ---------------------------------------------------------------------------
def fold_bn(key, dim):
    k1, k2, k3, k4 = jax.random.split(key, 4)
    gamma = 1.0 + 0.1 * jax.random.normal(k1, (dim,), jnp.float32)
    beta = 0.1 * jax.random.normal(k2, (dim,), jnp.float32)
    mean = 0.1 * jax.random.normal(k3, (dim,), jnp.float32)
    var = 1.0 + 0.1 * jnp.abs(jax.random.normal(k4, (dim,), jnp.float32))
    scale = gamma / jnp.sqrt(var + BN_EPS)
    shift = beta - mean * scale
    return scale, shift


def make_params(key):
    keys = jax.random.split(key, 24)
    ki = iter(keys)
    H, D = HIDDEN_DIM, INPUT_DIM
    p = {}
    p["bnf_s"], p["bnf_b"] = fold_bn(next(ki), D)
    p["featW"] = jax.random.normal(next(ki), (D, H), jnp.float32) / np.sqrt(D)
    p["featb"] = 0.1 * jax.random.normal(next(ki), (H,), jnp.float32)

    cs, csh, cW, cb = [], [], [], []
    for _ in range(NUM_CONV_LAYERS):
        s, b = fold_bn(next(ki), H)
        cs.append(s); csh.append(b)
        cW.append(jax.random.normal(next(ki), (H, H), jnp.float32) / np.sqrt(H))
        cb.append(0.1 * jax.random.normal(next(ki), (H,), jnp.float32))
    p["cbn_s"] = jnp.stack(cs); p["cbn_b"] = jnp.stack(csh)
    p["cW"] = jnp.stack(cW); p["cb"] = jnp.stack(cb)

    p["fbn_s"], p["fbn_b"] = fold_bn(next(ki), H)
    p["fW"] = jax.random.normal(next(ki), (H, H), jnp.float32) / np.sqrt(H)
    p["fb"] = 0.1 * jax.random.normal(next(ki), (H,), jnp.float32)

    p["bnh_s"], p["bnh_b"] = fold_bn(next(ki), H)
    p["pW1"] = jax.random.normal(next(ki), (H, H), jnp.float32) / np.sqrt(H)
    p["pb1"] = 0.1 * jax.random.normal(next(ki), (H,), jnp.float32)
    p["pW2"] = jax.random.normal(next(ki), (H, H), jnp.float32) / np.sqrt(H)
    p["pb2"] = 0.1 * jax.random.normal(next(ki), (H,), jnp.float32)
    return p


def pack_params(p):
    """Fold the vector-wise BatchNorms (feat / fc / hidden) into the weight slab and
    additive vectors; conv BN scale/shift and conv biases are passed as raw [L,H]
    vectors and applied in-kernel (no dense per-node slab)."""
    H, D = HIDDEN_DIM, INPUT_DIM
    featW_fold = p["bnf_s"][:, None] * p["featW"]                       # [D, H]
    featW_pad = jnp.zeros((H, H), jnp.float32).at[:D].set(featW_fold)   # pad K to 128 lanes
    add_feat = p["bnf_b"] @ p["featW"] + p["featb"]                     # [H]

    fW_fold = p["fbn_s"][:, None] * p["fW"]
    add_fc = p["fbn_b"] @ p["fW"] + p["fb"]

    pW1_fold = p["bnh_s"][:, None] * p["pW1"]
    add_p1 = p["bnh_b"] @ p["pW1"] + p["pb1"]

    w_all = jnp.concatenate(
        [featW_pad[None], p["cW"], fW_fold[None], pW1_fold[None], p["pW2"][None]],
        axis=0).astype(jnp.bfloat16)                                    # [7, H, H]

    vec_all = jnp.concatenate(
        [jnp.stack([add_feat, add_fc, add_p1, p["pb2"]], axis=0),       # [4, H]
         p["cbn_s"], p["cbn_b"], p["cb"]],                              # [3L, H]
        axis=0).astype(jnp.float32)                                     # [13, H]
    return w_all, vec_all


def make_graph(key):
    """Per-batch block-diagonal random adjacency with GraphConv 'both'
    normalization (degrees clamped to 1, as DGL does) + shared sum-pool matrix."""
    keys = jax.random.split(key, BATCH)
    block_mask = np.zeros((NUM_NODES, NUM_NODES), np.float32)
    pool_np = np.zeros((GRAPHS_PER_BATCH, NUM_NODES), np.float32)
    for g in range(GRAPHS_PER_BATCH):
        s = g * NODES_PER_GRAPH
        block_mask[s:s + NODES_PER_GRAPH, s:s + NODES_PER_GRAPH] = 1.0
        pool_np[g, s:s + NODES_PER_GRAPH] = 1.0
    block_mask = jnp.asarray(block_mask)

    adjs = []
    for b in range(BATCH):
        a = (jax.random.uniform(keys[b], (NUM_NODES, NUM_NODES)) < 0.3).astype(jnp.float32)
        A = a * block_mask                                   # A[i, j] = 1 <=> edge j -> i
        d_out = jnp.maximum(A.sum(axis=0), 1.0)              # out-degree of source nodes
        d_in = jnp.maximum(A.sum(axis=1), 1.0)               # in-degree of destination nodes
        adjs.append((d_in[:, None] ** -0.5) * A * (d_out[None, :] ** -0.5))
    return jnp.stack(adjs), jnp.asarray(pool_np)


def fuse_batches(h_pad, adj, pool):
    """Fuse all batch items into one grid step: block-diagonal adjacency / pooling,
    concatenated node rows. Used on single-TensorCore chips (v5e / v6e)."""
    B, N, H = h_pad.shape
    G = pool.shape[0]
    h_f = h_pad.reshape(1, B * N, H)
    adj_f = jnp.zeros((B * N, B * N), adj.dtype)
    pool_f = jnp.zeros((B * G, B * N), pool.dtype)
    for b in range(B):
        adj_f = adj_f.at[b * N:(b + 1) * N, b * N:(b + 1) * N].set(adj[b])
        pool_f = pool_f.at[b * G:(b + 1) * G, b * N:(b + 1) * N].set(pool)
    return h_f, adj_f[None], pool_f


if __name__ == "__main__":
    root = jax.random.PRNGKey(0)
    k_feat, k_graph, k_param = jax.random.split(root, 3)

    h = jax.random.normal(k_feat, (BATCH, NUM_NODES, INPUT_DIM), jnp.float32)
    adj_f32, pool_f32 = make_graph(k_graph)
    params = make_params(k_param)
    w_all, vec_all = pack_params(params)

    # Pad node features to the lane-dense hidden width (zero columns x zero
    # weight rows => no effect on the result); bf16 MXU operands.
    h_pad = jnp.zeros((BATCH, NUM_NODES, HIDDEN_DIM), jnp.float32)
    h_pad = h_pad.at[:, :, :INPUT_DIM].set(h).astype(jnp.bfloat16)
    adj_bf = adj_f32.astype(jnp.bfloat16)
    pool_bf = pool_f32.astype(jnp.bfloat16)

    # v7x has 2 TensorCores -> keep one batch item per (parallel) grid step.
    # v5e/v6e have 1 TC -> fuse both batch items into a single 256-row step.
    kind = jax.devices()[0].device_kind.lower().replace(" ", "")
    two_tensorcores = ("v7" in kind) or ("7x" in kind)

    if two_tensorcores:
        out = resgcn_forward(h_pad, adj_bf, pool_bf, w_all, vec_all)
    else:
        h_f, adj_f, pool_f = fuse_batches(h_pad, adj_bf, pool_bf)
        out_f = resgcn_forward(h_f, adj_f, pool_f, w_all, vec_all)
        out = out_f.reshape(BATCH, GRAPHS_PER_BATCH, HIDDEN_DIM)
    out = jax.block_until_ready(out)

    ref = jax.block_until_ready(resgcn_reference(h, adj_f32, pool_f32, params))
    out_np = np.asarray(out, np.float32)
    ref_np = np.asarray(ref, np.float32)
    rel_err = np.linalg.norm(out_np - ref_np) / np.linalg.norm(ref_np)
    assert rel_err < 3e-2, f"relative error too large vs reference: {rel_err:.4e}"

    print("KERNEL_OK")
</pallas_src>

<mosaic_0001>
module attributes {stable_mosaic.version = 11 : i64} {
  func.func @resgcn_kernel(%arg0: i32, %arg1: memref<1x256x128xbf16, #tpu.memory_space<vmem>>, %arg2: memref<1x256x256xbf16, #tpu.memory_space<vmem>>, %arg3: memref<16x256xbf16, #tpu.memory_space<vmem>>, %arg4: memref<7x128x128xbf16, #tpu.memory_space<vmem>>, %arg5: memref<13x128xf32, #tpu.memory_space<vmem>>, %arg6: memref<1x16x128xf32, #tpu.memory_space<vmem>>) attributes {dimension_semantics = [#tpu.dimension_semantics<parallel>], iteration_bounds = array<i64: 1>, scalar_prefetch = 0 : i64, scratch_operands = 0 : i64, tpu.core_type = #tpu.core_type<tc>, window_params = [{transform_indices = @transform_0, window_bounds = array<i64: 1, 256, 128>}, {transform_indices = @transform_1, window_bounds = array<i64: 1, 256, 256>}, {pipeline_mode = #tpu.pipeline_mode<synchronous>, transform_indices = @transform_2, window_bounds = array<i64: 16, 256>}, {pipeline_mode = #tpu.pipeline_mode<synchronous>, transform_indices = @transform_3, window_bounds = array<i64: 7, 128, 128>}, {pipeline_mode = #tpu.pipeline_mode<synchronous>, transform_indices = @transform_4, window_bounds = array<i64: 13, 128>}, {transform_indices = @transform_5, window_bounds = array<i64: 1, 16, 128>}]} {
    %c0 = arith.constant 0 : index
    %c0_0 = arith.constant 0 : index
    %0 = vector.load %arg5[%c0, %c0_0] : memref<13x128xf32, #tpu.memory_space<vmem>>, vector<13x128xf32>
    %c0_1 = arith.constant 0 : index
    %c0_2 = arith.constant 0 : index
    %c0_3 = arith.constant 0 : index
    %1 = vector.load %arg2[%c0_1, %c0_2, %c0_3] : memref<1x256x256xbf16, #tpu.memory_space<vmem>>, vector<1x256x256xbf16>
    %2 = vector.shape_cast %1 : vector<1x256x256xbf16> to vector<256x256xbf16>
    %c0_4 = arith.constant 0 : index
    %c0_5 = arith.constant 0 : index
    %c0_6 = arith.constant 0 : index
    %3 = vector.load %arg1[%c0_4, %c0_5, %c0_6] : memref<1x256x128xbf16, #tpu.memory_space<vmem>>, vector<1x256x128xbf16>
    %4 = vector.shape_cast %3 : vector<1x256x128xbf16> to vector<256x128xbf16>
    %c0_7 = arith.constant 0 : index
    %c0_8 = arith.constant 0 : index
    %c0_9 = arith.constant 0 : index
    %5 = vector.load %arg4[%c0_7, %c0_8, %c0_9] : memref<7x128x128xbf16, #tpu.memory_space<vmem>>, vector<1x128x128xbf16>
    %6 = vector.shape_cast %5 : vector<1x128x128xbf16> to vector<128x128xbf16>
    %cst = arith.constant dense<0.000000e+00> : vector<256x128xf32>
    %7 = tpu.matmul %4, %6, %cst {dimension_numbers = #tpu.dot_dimension_numbers<[1], [0], [0], [1], [0, 0, 1, 1], [], []>} : vector<256x128xbf16>, vector<128x128xbf16>, vector<256x128xf32> -> vector<256x128xf32>
    %8 = vector.extract_strided_slice %0 {offsets = [0, 0], sizes = [1, 128], strides = [1, 1]} : vector<13x128xf32> to vector<1x128xf32>
    %9 = vector.broadcast %8 : vector<1x128xf32> to vector<256x128xf32>
    %10 = arith.addf %7, %9 : vector<256x128xf32>
    %cst_10 = arith.constant 0.000000e+00 : f32
    %11 = vector.broadcast %cst_10 : f32 to vector<256x128xf32>
    %12 = arith.maximumf %10, %11 : vector<256x128xf32>
    %13 = arith.truncf %12 : vector<256x128xf32> to vector<256x128xbf16>
    %14 = vector.extract_strided_slice %0 {offsets = [4, 0], sizes = [1, 128], strides = [1, 1]} : vector<13x128xf32> to vector<1x128xf32>
    %15 = vector.extract_strided_slice %0 {offsets = [7, 0], sizes = [1, 128], strides = [1, 1]} : vector<13x128xf32> to vector<1x128xf32>
    %16 = vector.extract_strided_slice %0 {offsets = [10, 0], sizes = [1, 128], strides = [1, 1]} : vector<13x128xf32> to vector<1x128xf32>
    %17 = arith.extf %13 : vector<256x128xbf16> to vector<256x128xf32>
    %18 = vector.broadcast %14 : vector<1x128xf32> to vector<256x128xf32>
    %19 = arith.mulf %17, %18 : vector<256x128xf32>
    %20 = vector.broadcast %15 : vector<1x128xf32> to vector<256x128xf32>
    %21 = arith.addf %19, %20 : vector<256x128xf32>
    %22 = arith.truncf %21 : vector<256x128xf32> to vector<256x128xbf16>
    %cst_11 = arith.constant dense<0.000000e+00> : vector<256x128xf32>
    %23 = tpu.matmul %2, %22, %cst_11 {dimension_numbers = #tpu.dot_dimension_numbers<[1], [0], [0], [1], [0, 0, 1, 1], [], []>} : vector<256x256xbf16>, vector<256x128xbf16>, vector<256x128xf32> -> vector<256x128xf32>
    %24 = arith.truncf %23 : vector<256x128xf32> to vector<256x128xbf16>
    %c1 = arith.constant 1 : index
    %c0_12 = arith.constant 0 : index
    %c0_13 = arith.constant 0 : index
    %25 = vector.load %arg4[%c1, %c0_12, %c0_13] : memref<7x128x128xbf16, #tpu.memory_space<vmem>>, vector<1x128x128xbf16>
    %26 = vector.shape_cast %25 : vector<1x128x128xbf16> to vector<128x128xbf16>
    %cst_14 = arith.constant dense<0.000000e+00> : vector<256x128xf32>
    %27 = tpu.matmul %24, %26, %cst_14 {dimension_numbers = #tpu.dot_dimension_numbers<[1], [0], [0], [1], [0, 0, 1, 1], [], []>} : vector<256x128xbf16>, vector<128x128xbf16>, vector<256x128xf32> -> vector<256x128xf32>
    %28 = vector.broadcast %16 : vector<1x128xf32> to vector<256x128xf32>
    %29 = arith.addf %27, %28 : vector<256x128xf32>
    %cst_15 = arith.constant 0.000000e+00 : f32
    %30 = vector.broadcast %cst_15 : f32 to vector<256x128xf32>
    %31 = arith.maximumf %29, %30 : vector<256x128xf32>
    %32 = arith.truncf %31 : vector<256x128xf32> to vector<256x128xbf16>
    %33 = vector.extract_strided_slice %0 {offsets = [5, 0], sizes = [1, 128], strides = [1, 1]} : vector<13x128xf32> to vector<1x128xf32>
    %34 = vector.extract_strided_slice %0 {offsets = [8, 0], sizes = [1, 128], strides = [1, 1]} : vector<13x128xf32> to vector<1x128xf32>
    %35 = vector.extract_strided_slice %0 {offsets = [11, 0], sizes = [1, 128], strides = [1, 1]} : vector<13x128xf32> to vector<1x128xf32>
    %36 = arith.extf %32 : vector<256x128xbf16> to vector<256x128xf32>
    %37 = vector.broadcast %33 : vector<1x128xf32> to vector<256x128xf32>
    %38 = arith.mulf %36, %37 : vector<256x128xf32>
    %39 = vector.broadcast %34 : vector<1x128xf32> to vector<256x128xf32>
    %40 = arith.addf %38, %39 : vector<256x128xf32>
    %41 = arith.truncf %40 : vector<256x128xf32> to vector<256x128xbf16>
    %cst_16 = arith.constant dense<0.000000e+00> : vector<256x128xf32>
    %42 = tpu.matmul %2, %41, %cst_16 {dimension_numbers = #tpu.dot_dimension_numbers<[1], [0], [0], [1], [0, 0, 1, 1], [], []>} : vector<256x256xbf16>, vector<256x128xbf16>, vector<256x128xf32> -> vector<256x128xf32>
    %43 = arith.truncf %42 : vector<256x128xf32> to vector<256x128xbf16>
    %c2 = arith.constant 2 : index
    %c0_17 = arith.constant 0 : index
    %c0_18 = arith.constant 0 : index
    %44 = vector.load %arg4[%c2, %c0_17, %c0_18] : memref<7x128x128xbf16, #tpu.memory_space<vmem>>, vector<1x128x128xbf16>
    %45 = vector.shape_cast %44 : vector<1x128x128xbf16> to vector<128x128xbf16>
    %cst_19 = arith.constant dense<0.000000e+00> : vector<256x128xf32>
    %46 = tpu.matmul %43, %45, %cst_19 {dimension_numbers = #tpu.dot_dimension_numbers<[1], [0], [0], [1], [0, 0, 1, 1], [], []>} : vector<256x128xbf16>, vector<128x128xbf16>, vector<256x128xf32> -> vector<256x128xf32>
    %47 = vector.broadcast %35 : vector<1x128xf32> to vector<256x128xf32>
    %48 = arith.addf %46, %47 : vector<256x128xf32>
    %cst_20 = arith.constant 0.000000e+00 : f32
    %49 = vector.broadcast %cst_20 : f32 to vector<256x128xf32>
    %50 = arith.maximumf %48, %49 : vector<256x128xf32>
    %51 = arith.truncf %50 : vector<256x128xf32> to vector<256x128xbf16>
    %52 = vector.extract_strided_slice %0 {offsets = [6, 0], sizes = [1, 128], strides = [1, 1]} : vector<13x128xf32> to vector<1x128xf32>
    %53 = vector.extract_strided_slice %0 {offsets = [9, 0], sizes = [1, 128], strides = [1, 1]} : vector<13x128xf32> to vector<1x128xf32>
    %54 = vector.extract_strided_slice %0 {offsets = [12, 0], sizes = [1, 128], strides = [1, 1]} : vector<13x128xf32> to vector<1x128xf32>
    %55 = arith.extf %51 : vector<256x128xbf16> to vector<256x128xf32>
    %56 = vector.broadcast %52 : vector<1x128xf32> to vector<256x128xf32>
    %57 = arith.mulf %55, %56 : vector<256x128xf32>
    %58 = vector.broadcast %53 : vector<1x128xf32> to vector<256x128xf32>
    %59 = arith.addf %57, %58 : vector<256x128xf32>
    %60 = arith.truncf %59 : vector<256x128xf32> to vector<256x128xbf16>
    %cst_21 = arith.constant dense<0.000000e+00> : vector<256x128xf32>
    %61 = tpu.matmul %2, %60, %cst_21 {dimension_numbers = #tpu.dot_dimension_numbers<[1], [0], [0], [1], [0, 0, 1, 1], [], []>} : vector<256x256xbf16>, vector<256x128xbf16>, vector<256x128xf32> -> vector<256x128xf32>
    %62 = arith.truncf %61 : vector<256x128xf32> to vector<256x128xbf16>
    %c3 = arith.constant 3 : index
    %c0_22 = arith.constant 0 : index
    %c0_23 = arith.constant 0 : index
    %63 = vector.load %arg4[%c3, %c0_22, %c0_23] : memref<7x128x128xbf16, #tpu.memory_space<vmem>>, vector<1x128x128xbf16>
    %64 = vector.shape_cast %63 : vector<1x128x128xbf16> to vector<128x128xbf16>
    %cst_24 = arith.constant dense<0.000000e+00> : vector<256x128xf32>
    %65 = tpu.matmul %62, %64, %cst_24 {dimension_numbers = #tpu.dot_dimension_numbers<[1], [0], [0], [1], [0, 0, 1, 1], [], []>} : vector<256x128xbf16>, vector<128x128xbf16>, vector<256x128xf32> -> vector<256x128xf32>
    %66 = vector.broadcast %54 : vector<1x128xf32> to vector<256x128xf32>
    %67 = arith.addf %65, %66 : vector<256x128xf32>
    %cst_25 = arith.constant 0.000000e+00 : f32
    %68 = vector.broadcast %cst_25 : f32 to vector<256x128xf32>
    %69 = arith.maximumf %67, %68 : vector<256x128xf32>
    %70 = arith.truncf %69 : vector<256x128xf32> to vector<256x128xbf16>
    %c0_26 = arith.constant 0 : index
    %c0_27 = arith.constant 0 : index
    %71 = vector.load %arg3[%c0_26, %c0_27] : memref<16x256xbf16, #tpu.memory_space<vmem>>, vector<16x256xbf16>
    %cst_28 = arith.constant dense<0.000000e+00> : vector<16x128xf32>
    %72 = tpu.matmul %71, %70, %cst_28 {dimension_numbers = #tpu.dot_dimension_numbers<[1], [0], [0], [1], [0, 0, 1, 1], [], []>} : vector<16x256xbf16>, vector<256x128xbf16>, vector<16x128xf32> -> vector<16x128xf32>
    %73 = arith.truncf %72 : vector<16x128xf32> to vector<16x128xbf16>
    %c4 = arith.constant 4 : index
    %c0_29 = arith.constant 0 : index
    %c0_30 = arith.constant 0 : index
    %74 = vector.load %arg4[%c4, %c0_29, %c0_30] : memref<7x128x128xbf16, #tpu.memory_space<vmem>>, vector<1x128x128xbf16>
    %75 = vector.shape_cast %74 : vector<1x128x128xbf16> to vector<128x128xbf16>
    %cst_31 = arith.constant dense<0.000000e+00> : vector<16x128xf32>
    %76 = tpu.matmul %73, %75, %cst_31 {dimension_numbers = #tpu.dot_dimension_numbers<[1], [0], [0], [1], [0, 0, 1, 1], [], []>} : vector<16x128xbf16>, vector<128x128xbf16>, vector<16x128xf32> -> vector<16x128xf32>
    %77 = vector.extract_strided_slice %0 {offsets = [1, 0], sizes = [1, 128], strides = [1, 1]} : vector<13x128xf32> to vector<1x128xf32>
    %78 = vector.broadcast %77 : vector<1x128xf32> to vector<16x128xf32>
    %79 = arith.addf %76, %78 : vector<16x128xf32>
    %cst_32 = arith.constant 0.000000e+00 : f32
    %80 = vector.broadcast %cst_32 : f32 to vector<16x128xf32>
    %81 = arith.maximumf %79, %80 : vector<16x128xf32>
    %82 = arith.truncf %81 : vector<16x128xf32> to vector<16x128xbf16>
    %c5 = arith.constant 5 : index
    %c0_33 = arith.constant 0 : index
    %c0_34 = arith.constant 0 : index
    %83 = vector.load %arg4[%c5, %c0_33, %c0_34] : memref<7x128x128xbf16, #tpu.memory_space<vmem>>, vector<1x128x128xbf16>
    %84 = vector.shape_cast %83 : vector<1x128x128xbf16> to vector<128x128xbf16>
    %cst_35 = arith.constant dense<0.000000e+00> : vector<16x128xf32>
    %85 = tpu.matmul %82, %84, %cst_35 {dimension_numbers = #tpu.dot_dimension_numbers<[1], [0], [0], [1], [0, 0, 1, 1], [], []>} : vector<16x128xbf16>, vector<128x128xbf16>, vector<16x128xf32> -> vector<16x128xf32>
    %86 = vector.extract_strided_slice %0 {offsets = [2, 0], sizes = [1, 128], strides = [1, 1]} : vector<13x128xf32> to vector<1x128xf32>
    %87 = vector.broadcast %86 : vector<1x128xf32> to vector<16x128xf32>
    %88 = arith.addf %85, %87 : vector<16x128xf32>
    %cst_36 = arith.constant 0.000000e+00 : f32
    %89 = vector.broadcast %cst_36 : f32 to vector<16x128xf32>
    %90 = arith.maximumf %88, %89 : vector<16x128xf32>
    %91 = arith.truncf %90 : vector<16x128xf32> to vector<16x128xbf16>
    %c6 = arith.constant 6 : index
    %c0_37 = arith.constant 0 : index
    %c0_38 = arith.constant 0 : index
    %92 = vector.load %arg4[%c6, %c0_37, %c0_38] : memref<7x128x128xbf16, #tpu.memory_space<vmem>>, vector<1x128x128xbf16>
    %93 = vector.shape_cast %92 : vector<1x128x128xbf16> to vector<128x128xbf16>
    %cst_39 = arith.constant dense<0.000000e+00> : vector<16x128xf32>
    %94 = tpu.matmul %91, %93, %cst_39 {dimension_numbers = #tpu.dot_dimension_numbers<[1], [0], [0], [1], [0, 0, 1, 1], [], []>} : vector<16x128xbf16>, vector<128x128xbf16>, vector<16x128xf32> -> vector<16x128xf32>
    %95 = vector.extract_strided_slice %0 {offsets = [3, 0], sizes = [1, 128], strides = [1, 1]} : vector<13x128xf32> to vector<1x128xf32>
    %96 = vector.broadcast %95 : vector<1x128xf32> to vector<16x128xf32>
    %97 = arith.addf %94, %96 : vector<16x128xf32>
    %c0_40 = arith.constant 0 : index
    %c0_41 = arith.constant 0 : index
    %c0_42 = arith.constant 0 : index
    %98 = vector.load %arg6[%c0_40, %c0_41, %c0_42] : memref<1x16x128xf32, #tpu.memory_space<vmem>>, vector<1x16x128xf32>
    %99 = vector.shape_cast %98 : vector<1x16x128xf32> to vector<16x128xf32>
    %100 = vector.shape_cast %97 : vector<16x128xf32> to vector<1x16x128xf32>
    tpu.vector_store %arg6[%c0_40, %c0_41, %c0_42], %100 {strides = array<i32>} : memref<1x16x128xf32, #tpu.memory_space<vmem>>, vector<1x16x128xf32>,
    return
  }
  func.func @transform_0(%arg0: i32) -> (i32, i32, i32) {
    %c0_i32 = arith.constant 0 : i32
    %c0_i32_0 = arith.constant 0 : i32
    %c0_i32_1 = arith.constant 0 : i32
    return %arg0, %c0_i32, %c0_i32_0 : i32, i32, i32
  }
  func.func @transform_1(%arg0: i32) -> (i32, i32, i32) {
    %c0_i32 = arith.constant 0 : i32
    %c0_i32_0 = arith.constant 0 : i32
    %c0_i32_1 = arith.constant 0 : i32
    return %arg0, %c0_i32, %c0_i32_0 : i32, i32, i32
  }
  func.func @transform_2(%arg0: i32) -> (i32, i32) {
    %c0_i32 = arith.constant 0 : i32
    %c0_i32_0 = arith.constant 0 : i32
    %c0_i32_1 = arith.constant 0 : i32
    return %c0_i32, %c0_i32_0 : i32, i32
  }
  func.func @transform_3(%arg0: i32) -> (i32, i32, i32) {
    %c0_i32 = arith.constant 0 : i32
    %c0_i32_0 = arith.constant 0 : i32
    %c0_i32_1 = arith.constant 0 : i32
    %c0_i32_2 = arith.constant 0 : i32
    return %c0_i32, %c0_i32_0, %c0_i32_1 : i32, i32, i32
  }
  func.func @transform_4(%arg0: i32) -> (i32, i32) {
    %c0_i32 = arith.constant 0 : i32
    %c0_i32_0 = arith.constant 0 : i32
    %c0_i32_1 = arith.constant 0 : i32
    return %c0_i32, %c0_i32_0 : i32, i32
  }
  func.func @transform_5(%arg0: i32) -> (i32, i32, i32) {
    %c0_i32 = arith.constant 0 : i32
    %c0_i32_0 = arith.constant 0 : i32
    %c0_i32_1 = arith.constant 0 : i32
    return %arg0, %c0_i32, %c0_i32_0 : i32, i32, i32
  }
}

</mosaic_0001>

<llo_original>
// kernel: tpu_custom_call.1
$region0: #{tpu_custom_call.1}
  #allocation0 [shape = 'u32[]', space=smem, size = 0x4, offset = 0x4, fixed_abs, tag = 'smem constant byte address 0x4 - core index']
  #allocation1 [shape = 'u32[72,128]{1,0:T(1,128)}', space=vmem, size = 0x9000, scoped, tag = 'internal scratch']
  %s0 = inlined_call_operand.hbm [shape: bf16[1,256,128], index: 0, kind: input, shape index: {}]
  %s1 = inlined_call_operand.hbm [shape: bf16[1,256,256], index: 1, kind: input, shape index: {}]
  %s2 = inlined_call_operand.hbm [shape: bf16[16,256], index: 2, kind: input, shape index: {}]
  %s3 = inlined_call_operand.hbm [shape: bf16[7,128,128], index: 3, kind: input, shape index: {}]
  %s4 = inlined_call_operand.hbm [shape: f32[13,128], index: 4, kind: input, shape index: {}]
  %s5 = inlined_call_operand.hbm [shape: f32[1,16,128], index: 5, kind: output, shape index: {}]
  %s6 = sld [smem:[#allocation0]]
  $region50: #{tpu_custom_call.1} parent=0
    _
  %s8 = ssub.s32 1, %s6
  %s9 = scalar_select 0, %s8, %s6
  $region1: #{tpu_custom_call.1} parent=0
    #allocation2 [shape = 'u8[65536]{0}', space=vmem, size = 0x10000, scoped, tag = 'input window, operand 0, single buffered']
    #allocation3 [shape = 's32[1]{0}', space=sflag, size = 0x4, scoped, tag = 'scoped memory for tpu_custom_call.1']
    #allocation4 [shape = 's32[1]{0}', space=sflag, size = 0x4, scoped, tag = 'scoped memory for tpu_custom_call.1']
    #allocation5 [shape = 'u8[131072]{0}', space=vmem, size = 0x20000, scoped, tag = 'input window, operand 1, single buffered']
    #allocation6 [shape = 's32[1]{0}', space=sflag, size = 0x4, scoped, tag = 'scoped memory for tpu_custom_call.1']
    #allocation7 [shape = 'u8[8192]{0}', space=vmem, size = 0x2000, scoped, tag = 'input window, operand 2, single buffered']
    #allocation8 [shape = 'u8[229376]{0}', space=vmem, size = 0x38000, scoped, tag = 'input window, operand 3, single buffered']
    #allocation9 [shape = 's32[1]{0}', space=sflag, size = 0x4, scoped, tag = 'scoped memory for tpu_custom_call.1']
    #allocation10 [shape = 'u8[8192]{0}', space=vmem, size = 0x2000, scoped, tag = 'input window, operand 4, single buffered']
    #allocation11 [shape = 'u8[8192]{0}', space=vmem, size = 0x2000, scoped, tag = 'output window, operand 0, single buffered']
    %10 = vsyncpa [#allocation3], 0
    %11 = vsyncpa [#allocation6], 0
    %12 = vsyncpa [#allocation9], 0
    %13 = vsyncpa [#allocation4], 0
    // Predicated region
    $region2: #{tpu_custom_call.1} parent=1 // pred_check
      _
    $region3: #{tpu_custom_call.1} parent=1 // pred_check_branch
      %15 = sbr.rel (0) target = $region5
    $region4: #{tpu_custom_call.1} parent=1 // pred_region
      %17 = vsyncadd [#allocation3], 0
      %s18 = sshll.u32 %s0, 4
      %s19 = int_to_ptr.hbm [resolvable:$true] %s18
      %s20 = sshll.u32 [#allocation2], 4
      %s21 = int_to_ptr.vmem [resolvable:$true] %s20
      %26 = dma.hbm_to_vmem [thread:$0]  %s19, 2048, %s21, [#allocation3], 64, 64, 4
    $region5: #{tpu_custom_call.1} parent=1 // pred_fallthru
      _
    // Predicated region
    $region6: #{tpu_custom_call.1} parent=1 // pred_check
      _
    $region7: #{tpu_custom_call.1} parent=1 // pred_check_branch
      %28 = sbr.rel (0) target = $region9
    $region8: #{tpu_custom_call.1} parent=1 // pred_region
      %30 = vsyncadd [#allocation6], 0
      %s31 = sshll.u32 %s1, 4
      %s32 = int_to_ptr.hbm [resolvable:$true] %s31
      %s33 = sshll.u32 [#allocation5], 4
      %s34 = int_to_ptr.vmem [resolvable:$true] %s33
      %39 = dma.hbm_to_vmem [thread:$0]  %s32, 4096, %s34, [#allocation6], 128, 128, 8
    $region9: #{tpu_custom_call.1} parent=1 // pred_fallthru
      _
    // Predicated region
    $region10: #{tpu_custom_call.1} parent=1 // pred_check
      _
    $region11: #{tpu_custom_call.1} parent=1 // pred_check_branch
      %41 = sbr.rel (0) target = $region13
    $region12: #{tpu_custom_call.1} parent=1 // pred_region
      %43 = vsyncadd [#allocation6], 0
      %s44 = sshll.u32 %s2, 4
      %s45 = int_to_ptr.hbm [resolvable:$true] %s44
      %s46 = sshll.u32 [#allocation7], 4
      %s47 = int_to_ptr.vmem [resolvable:$true] %s46
      %52 = dma.hbm_to_vmem [thread:$0]  %s45, 256, %s47, [#allocation6], 128, 128, 8
    $region13: #{tpu_custom_call.1} parent=1 // pred_fallthru
      _
    // Predicated region
    $region14: #{tpu_custom_call.1} parent=1 // pred_check
      _
    $region15: #{tpu_custom_call.1} parent=1 // pred_check_branch
      %54 = sbr.rel (0) target = $region17
    $region16: #{tpu_custom_call.1} parent=1 // pred_region
      %56 = vsyncadd [#allocation9], 0
      %s57 = sshll.u32 %s3, 4
      %s58 = int_to_ptr.hbm [resolvable:$true] %s57
      %s59 = sshll.u32 [#allocation8], 4
      %s60 = int_to_ptr.vmem [resolvable:$true] %s59
      %65 = dma.hbm_to_vmem [thread:$0]  %s58, 7168, %s60, [#allocation9], 64, 64, 4
    $region17: #{tpu_custom_call.1} parent=1 // pred_fallthru
      _
    // Predicated region
    $region18: #{tpu_custom_call.1} parent=1 // pred_check
      _
    $region19: #{tpu_custom_call.1} parent=1 // pred_check_branch
      %67 = sbr.rel (0) target = $region21
    $region20: #{tpu_custom_call.1} parent=1 // pred_region
      %69 = vsyncadd [#allocation9], 0
      %s70 = sshll.u32 %s4, 4
      %s71 = int_to_ptr.hbm [resolvable:$true] %s70
      %s72 = sshll.u32 [#allocation10], 4
      %s73 = int_to_ptr.vmem [resolvable:$true] %s72
      %78 = dma.hbm_to_vmem [thread:$0]  %s71, 256, %s73, [#allocation9], 128, 128, 8
    $region21: #{tpu_custom_call.1} parent=1 // pred_fallthru
      _
    // Predicated region
    $region22: #{tpu_custom_call.1} parent=1 // pred_check
      _
    $region23: #{tpu_custom_call.1} parent=1 // pred_check_branch
      %80 = sbr.rel (0) target = $region25
    $region24: #{tpu_custom_call.1} parent=1 // pred_region
      %82 = dma.done [#allocation3], 2048
    $region25: #{tpu_custom_call.1} parent=1 // pred_fallthru
      _
    // Predicated region
    $region26: #{tpu_custom_call.1} parent=1 // pred_check
      _
    $region27: #{tpu_custom_call.1} parent=1 // pred_check_branch
      %84 = sbr.rel (0) target = $region29
    $region28: #{tpu_custom_call.1} parent=1 // pred_region
      %86 = dma.done [#allocation6], 4096
    $region29: #{tpu_custom_call.1} parent=1 // pred_fallthru
      _
    // Predicated region
    $region30: #{tpu_custom_call.1} parent=1 // pred_check
      _
    $region31: #{tpu_custom_call.1} parent=1 // pred_check_branch
      %88 = sbr.rel (0) target = $region33
    $region32: #{tpu_custom_call.1} parent=1 // pred_region
      %90 = dma.done [#allocation6], 256
    $region33: #{tpu_custom_call.1} parent=1 // pred_fallthru
      _
    // Predicated region
    $region34: #{tpu_custom_call.1} parent=1 // pred_check
      _
    $region35: #{tpu_custom_call.1} parent=1 // pred_check_branch
      %92 = sbr.rel (0) target = $region37
    $region36: #{tpu_custom_call.1} parent=1 // pred_region
      %94 = dma.done [#allocation9], 7168
    $region37: #{tpu_custom_call.1} parent=1 // pred_fallthru
      _
    // Predicated region
    $region38: #{tpu_custom_call.1} parent=1 // pred_check
      _
    $region39: #{tpu_custom_call.1} parent=1 // pred_check_branch
      %96 = sbr.rel (0) target = $region41
    $region40: #{tpu_custom_call.1} parent=1 // pred_region
      %98 = dma.done [#allocation9], 256
    $region41: #{tpu_custom_call.1} parent=1 // pred_fallthru
      _
    %v99 = vld [vmem:[#allocation10] sm:$0xff]
    %v100 = vld [vmem:[#allocation10 + $0x8] sm:$0x1f]
    %v101 = vld [vmem:[#allocation5] sm:$0xff]
    %v102 = vld [vmem:[#allocation5 + $0x8] sm:$0xff]
    %v103 = vld [vmem:[#allocation5 + $0x10] sm:$0xff]
    %v104 = vld [vmem:[#allocation5 + $0x18] sm:$0xff]
    %v105 = vld [vmem:[#allocation5 + $0x20] sm:$0xff]
    %v106 = vld [vmem:[#allocation5 + $0x28] sm:$0xff]
    %v107 = vld [vmem:[#allocation5 + $0x30] sm:$0xff]
    %v108 = vld [vmem:[#allocation5 + $0x38] sm:$0xff]
    %v109 = vld [vmem:[#allocation5 + $0x40] sm:$0xff]
    %v110 = vld [vmem:[#allocation5 + $0x48] sm:$0xff]
    %v111 = vld [vmem:[#allocation5 + $0x50] sm:$0xff]
    %v112 = vld [vmem:[#allocation5 + $0x58] sm:$0xff]
    %v113 = vld [vmem:[#allocation5 + $0x60] sm:$0xff]
    %v114 = vld [vmem:[#allocation5 + $0x68] sm:$0xff]
    %v115 = vld [vmem:[#allocation5 + $0x70] sm:$0xff]
    %v116 = vld [vmem:[#allocation5 + $0x78] sm:$0xff]
    %v117 = vld [vmem:[#allocation5 + $0x80] sm:$0xff]
    %v118 = vld [vmem:[#allocation5 + $0x88] sm:$0xff]
    %v119 = vld [vmem:[#allocation5 + $0x90] sm:$0xff]
    %v120 = vld [vmem:[#allocation5 + $0x98] sm:$0xff]
    %v121 = vld [vmem:[#allocation5 + $0xa0] sm:$0xff]
    %v122 = vld [vmem:[#allocation5 + $0xa8] sm:$0xff]
    %v123 = vld [vmem:[#allocation5 + $0xb0] sm:$0xff]
    %v124 = vld [vmem:[#allocation5 + $0xb8] sm:$0xff]
    %v125 = vld [vmem:[#allocation5 + $0xc0] sm:$0xff]
    %v126 = vld [vmem:[#allocation5 + $0xc8] sm:$0xff]
    %v127 = vld [vmem:[#allocation5 + $0xd0] sm:$0xff]
    %v128 = vld [vmem:[#allocation5 + $0xd8] sm:$0xff]
    %v129 = vld [vmem:[#allocation5 + $0xe0] sm:$0xff]
    %v130 = vld [vmem:[#allocation5 + $0xe8] sm:$0xff]
    %v131 = vld [vmem:[#allocation5 + $0xf0] sm:$0xff]
    %v132 = vld [vmem:[#allocation5 + $0xf8] sm:$0xff]
    %v133 = vld [vmem:[#allocation2] sm:$0xf]
    %v134 = vld [vmem:[#allocation2 + $0x4] sm:$0xf]
    %v135 = vld [vmem:[#allocation2 + $0x8] sm:$0xf]
    %v136 = vld [vmem:[#allocation2 + $0xc] sm:$0xf]
    %v137 = vld [vmem:[#allocation2 + $0x10] sm:$0xf]
    %v138 = vld [vmem:[#allocation2 + $0x14] sm:$0xf]
    %v139 = vld [vmem:[#allocation2 + $0x18] sm:$0xf]
    %v140 = vld [vmem:[#allocation2 + $0x1c] sm:$0xf]
    %v141 = vld [vmem:[#allocation2 + $0x20] sm:$0xf]
    %v142 = vld [vmem:[#allocation2 + $0x24] sm:$0xf]
    %v143 = vld [vmem:[#allocation2 + $0x28] sm:$0xf]
    %v144 = vld [vmem:[#allocation2 + $0x2c] sm:$0xf]
    %v145 = vld [vmem:[#allocation2 + $0x30] sm:$0xf]
    %v146 = vld [vmem:[#allocation2 + $0x34] sm:$0xf]
    %v147 = vld [vmem:[#allocation2 + $0x38] sm:$0xf]
    %v148 = vld [vmem:[#allocation2 + $0x3c] sm:$0xf]
    %v149 = vld [vmem:[#allocation2 + $0x40] sm:$0xf]
    %v150 = vld [vmem:[#allocation2 + $0x44] sm:$0xf]
    %v151 = vld [vmem:[#allocation2 + $0x48] sm:$0xf]
    %v152 = vld [vmem:[#allocation2 + $0x4c] sm:$0xf]
    %v153 = vld [vmem:[#allocation2 + $0x50] sm:$0xf]
    %v154 = vld [vmem:[#allocation2 + $0x54] sm:$0xf]
    %v155 = vld [vmem:[#allocation2 + $0x58] sm:$0xf]
    %v156 = vld [vmem:[#allocation2 + $0x5c] sm:$0xf]
    %v157 = vld [vmem:[#allocation2 + $0x60] sm:$0xf]
    %v158 = vld [vmem:[#allocation2 + $0x64] sm:$0xf]
    %v159 = vld [vmem:[#allocation2 + $0x68] sm:$0xf]
    %v160 = vld [vmem:[#allocation2 + $0x6c] sm:$0xf]
    %v161 = vld [vmem:[#allocation2 + $0x70] sm:$0xf]
    %v162 = vld [vmem:[#allocation2 + $0x74] sm:$0xf]
    %v163 = vld [vmem:[#allocation2 + $0x78] sm:$0xf]
    %v164 = vld [vmem:[#allocation2 + $0x7c] sm:$0xf]
    %v165 = vld [vmem:[#allocation8] sm:$0xf]
    %v166 = vld [vmem:[#allocation8 + $0x4] sm:$0xf]
    %v167 = vld [vmem:[#allocation8 + $0x8] sm:$0xf]
    %v168 = vld [vmem:[#allocation8 + $0xc] sm:$0xf]
    %v169 = vld [vmem:[#allocation8 + $0x10] sm:$0xf]
    %v170 = vld [vmem:[#allocation8 + $0x14] sm:$0xf]
    %v171 = vld [vmem:[#allocation8 + $0x18] sm:$0xf]
    %v172 = vld [vmem:[#allocation8 + $0x1c] sm:$0xf]
    %v173 = vld [vmem:[#allocation8 + $0x20] sm:$0xf]
    %v174 = vld [vmem:[#allocation8 + $0x24] sm:$0xf]
    %v175 = vld [vmem:[#allocation8 + $0x28] sm:$0xf]
    %v176 = vld [vmem:[#allocation8 + $0x2c] sm:$0xf]
    %v177 = vld [vmem:[#allocation8 + $0x30] sm:$0xf]
    %v178 = vld [vmem:[#allocation8 + $0x34] sm:$0xf]
    %v179 = vld [vmem:[#allocation8 + $0x38] sm:$0xf]
    %v180 = vld [vmem:[#allocation8 + $0x3c] sm:$0xf]
    %v181 = vperm.slane %v99, 0
    %v214 = vunpack.c.l.b16 %v133
    %v215 = vunpack.c.l.b16 %v134
    %v216 = vunpack.c.l.b16 %v135
    %v217 = vunpack.c.l.b16 %v136
    %v218 = vunpack.c.l.b16 %v137
    %v219 = vunpack.c.l.b16 %v138
    %v220 = vunpack.c.l.b16 %v139
    %v221 = vunpack.c.l.b16 %v140
    %v222 = vunpack.c.l.b16 %v141
    %v223 = vunpack.c.l.b16 %v142
    %v224 = vunpack.c.l.b16 %v143
    %v225 = vunpack.c.l.b16 %v144
    %v226 = vunpack.c.l.b16 %v145
    %v227 = vunpack.c.l.b16 %v146
    %v228 = vunpack.c.l.b16 %v147
    %v229 = vunpack.c.l.b16 %v148
    %v230 = vunpack.c.l.b16 %v149
    %v231 = vunpack.c.l.b16 %v150
    %v232 = vunpack.c.l.b16 %v151
    %v233 = vunpack.c.l.b16 %v152
    %v234 = vunpack.c.l.b16 %v153
    %v235 = vunpack.c.l.b16 %v154
    %v236 = vunpack.c.l.b16 %v155
    %v237 = vunpack.c.l.b16 %v156
    %v238 = vunpack.c.l.b16 %v157
    %v239 = vunpack.c.l.b16 %v158
    %v240 = vunpack.c.l.b16 %v159
    %v241 = vunpack.c.l.b16 %v160
    %v242 = vunpack.c.l.b16 %v161
    %v243 = vunpack.c.l.b16 %v162
    %v244 = vunpack.c.l.b16 %v163
    %v245 = vunpack.c.l.b16 %v164
    %v246 = vpack.c.b16 %v215, %v214
    %v247 = vpack.c.b16 %v217, %v216
    %v248 = vpack.c.b16 %v219, %v218
    %v249 = vpack.c.b16 %v221, %v220
    %v250 = vpack.c.b16 %v223, %v222
    %v251 = vpack.c.b16 %v225, %v224
    %v252 = vpack.c.b16 %v227, %v226
    %v253 = vpack.c.b16 %v229, %v228
    %v254 = vpack.c.b16 %v231, %v230
    %v255 = vpack.c.b16 %v233, %v232
    %v256 = vpack.c.b16 %v235, %v234
    %v257 = vpack.c.b16 %v237, %v236
    %v258 = vpack.c.b16 %v239, %v238
    %v259 = vpack.c.b16 %v241, %v240
    %v260 = vpack.c.b16 %v243, %v242
    %v261 = vpack.c.b16 %v245, %v244
    %v294 = vunpack.c.l.b16 %v165
    %v295 = vunpack.c.l.b16 %v166
    %v296 = vunpack.c.l.b16 %v167
    %v297 = vunpack.c.l.b16 %v168
    %v298 = vunpack.c.l.b16 %v169
    %v299 = vunpack.c.l.b16 %v170
    %v300 = vunpack.c.l.b16 %v171
    %v301 = vunpack.c.l.b16 %v172
    %v302 = vunpack.c.l.b16 %v173
    %v303 = vunpack.c.l.b16 %v174
    %v304 = vunpack.c.l.b16 %v175
    %v305 = vunpack.c.l.b16 %v176
    %v306 = vunpack.c.l.b16 %v177
    %v307 = vunpack.c.l.b16 %v178
    %v308 = vunpack.c.l.b16 %v179
    %v309 = vunpack.c.l.b16 %v180
    %v310 = vpack.c.b16 %v295, %v294
    %v311 = vpack.c.b16 %v297, %v296
    %v312 = vpack.c.b16 %v299, %v298
    %v313 = vpack.c.b16 %v301, %v300
    %v314 = vpack.c.b16 %v303, %v302
    %v315 = vpack.c.b16 %v305, %v304
    %v316 = vpack.c.b16 %v307, %v306
    %v317 = vpack.c.b16 %v309, %v308
    %326 = vmatpush.bf16.msra.mxu0 %v317
    %327 = vmatpush.bf16.msra.mxu0 %v316
    %328 = vmatpush.bf16.msra.mxu0 %v315
    %329 = vmatpush.bf16.msra.mxu0 %v314
    %330 = vmatpush.bf16.msra.mxu0 %v313
    %331 = vmatpush.bf16.msra.mxu0 %v312
    %332 = vmatpush.bf16.msra.mxu0 %v311
    %333 = vmatpush.bf16.msra.mxu0 %v310
    %334 = vmatmul.bf16.gmra.mxu0 %v246
    %v335 = vpop.f32.mrf.mxu0
    %v336 = vadd.f32 %v181, %v335
    %v337 = vpop.f32.mrf.mxu0
    %v338 = vadd.f32 %v181, %v337
    %339 = vmatmul.bf16.gmra.mxu0 %v247
    %v340 = vpop.f32.mrf.mxu0
    %v341 = vadd.f32 %v181, %v340
    %v342 = vpop.f32.mrf.mxu0
    %v343 = vadd.f32 %v181, %v342
    %344 = vmatmul.bf16.gmra.mxu0 %v248
    %v345 = vpop.f32.mrf.mxu0
    %v346 = vadd.f32 %v181, %v345
    %v347 = vpop.f32.mrf.mxu0
    %v348 = vadd.f32 %v181, %v347
    %349 = vmatmul.bf16.gmra.mxu0 %v249
    %v350 = vpop.f32.mrf.mxu0
    %v351 = vadd.f32 %v181, %v350
    %v352 = vpop.f32.mrf.mxu0
    %v353 = vadd.f32 %v181, %v352
    %354 = vmatmul.bf16.gmra.mxu0 %v250
    %v355 = vpop.f32.mrf.mxu0
    %v356 = vadd.f32 %v181, %v355
    %v357 = vpop.f32.mrf.mxu0
    %v358 = vadd.f32 %v181, %v357
    %359 = vmatmul.bf16.gmra.mxu0 %v251
    %v360 = vpop.f32.mrf.mxu0
    %v361 = vadd.f32 %v181, %v360
    %v362 = vpop.f32.mrf.mxu0
    %v363 = vadd.f32 %v181, %v362
    %364 = vmatmul.bf16.gmra.mxu0 %v252
    %v365 = vpop.f32.mrf.mxu0
    %v366 = vadd.f32 %v181, %v365
    %v367 = vpop.f32.mrf.mxu0
    %v368 = vadd.f32 %v181, %v367
    %369 = vmatmul.bf16.gmra.mxu0 %v253
    %v370 = vpop.f32.mrf.mxu0
    %v371 = vadd.f32 %v181, %v370
    %v372 = vpop.f32.mrf.mxu0
    %v373 = vadd.f32 %v181, %v372
    %374 = vmatmul.bf16.gmra.mxu0 %v254
    %v375 = vpop.f32.mrf.mxu0
    %v376 = vadd.f32 %v181, %v375
    %v377 = vpop.f32.mrf.mxu0
    %v378 = vadd.f32 %v181, %v377
    %379 = vmatmul.bf16.gmra.mxu0 %v255
    %v380 = vpop.f32.mrf.mxu0
    %v381 = vadd.f32 %v181, %v380
    %v382 = vpop.f32.mrf.mxu0
    %v383 = vadd.f32 %v181, %v382
    %384 = vmatmul.bf16.gmra.mxu0 %v256
    %v385 = vpop.f32.mrf.mxu0
    %v386 = vadd.f32 %v181, %v385
    %v387 = vpop.f32.mrf.mxu0
    %v388 = vadd.f32 %v181, %v387
    %389 = vmatmul.bf16.gmra.mxu0 %v257
    %v390 = vpop.f32.mrf.mxu0
    %v391 = vadd.f32 %v181, %v390
    %v392 = vpop.f32.mrf.mxu0
    %v393 = vadd.f32 %v181, %v392
    %394 = vmatmul.bf16.gmra.mxu0 %v258
    %v395 = vpop.f32.mrf.mxu0
    %v396 = vadd.f32 %v181, %v395
    %v397 = vpop.f32.mrf.mxu0
    %v398 = vadd.f32 %v181, %v397
    %399 = vmatmul.bf16.gmra.mxu0 %v259
    %v400 = vpop.f32.mrf.mxu0
    %v401 = vadd.f32 %v181, %v400
    %v402 = vpop.f32.mrf.mxu0
    %v403 = vadd.f32 %v181, %v402
    %404 = vmatmul.bf16.gmra.mxu0 %v260
    %v405 = vpop.f32.mrf.mxu0
    %v406 = vadd.f32 %v181, %v405
    %v407 = vpop.f32.mrf.mxu0
    %v408 = vadd.f32 %v181, %v407
    %409 = vmatmul.bf16.gmra.mxu0 %v261
    %v410 = vpop.f32.mrf.mxu0
    %v411 = vadd.f32 %v181, %v410
    %v412 = vpop.f32.mrf.mxu0
    %v413 = vadd.f32 %v181, %v412
    %414 = vdwg.mxu0
    %v415 = vmax.f32 %v336, 0.0
    %v416 = vmax.f32 %v338, 0.0
    %v417 = vmax.f32 %v341, 0.0
    %v418 = vmax.f32 %v343, 0.0
    %v419 = vmax.f32 %v346, 0.0
    %v420 = vmax.f32 %v348, 0.0
    %v421 = vmax.f32 %v351, 0.0
    %v422 = vmax.f32 %v353, 0.0
    %v423 = vmax.f32 %v356, 0.0
    %v424 = vmax.f32 %v358, 0.0
    %v425 = vmax.f32 %v361, 0.0
    %v426 = vmax.f32 %v363, 0.0
    %v427 = vmax.f32 %v366, 0.0
    %v428 = vmax.f32 %v368, 0.0
    %v429 = vmax.f32 %v371, 0.0
    %v430 = vmax.f32 %v373, 0.0
    %v431 = vmax.f32 %v376, 0.0
    %v432 = vmax.f32 %v378, 0.0
    %v433 = vmax.f32 %v381, 0.0
    %v434 = vmax.f32 %v383, 0.0
    %v435 = vmax.f32 %v386, 0.0
    %v436 = vmax.f32 %v388, 0.0
    %v437 = vmax.f32 %v391, 0.0
    %v438 = vmax.f32 %v393, 0.0
    %v439 = vmax.f32 %v396, 0.0
    %v440 = vmax.f32 %v398, 0.0
    %v441 = vmax.f32 %v401, 0.0
    %v442 = vmax.f32 %v403, 0.0
    %v443 = vmax.f32 %v406, 0.0
    %v444 = vmax.f32 %v408, 0.0
    %v445 = vmax.f32 %v411, 0.0
    %v446 = vmax.f32 %v413, 0.0
    %v447 = vpack.c.bf16 %v415, %v415
    %v448 = vpack.c.bf16 %v416, %v416
    %v449 = vpack.c.bf16 %v417, %v417
    %v450 = vpack.c.bf16 %v418, %v418
    %v451 = vpack.c.bf16 %v419, %v419
    %v452 = vpack.c.bf16 %v420, %v420
    %v453 = vpack.c.bf16 %v421, %v421
    %v454 = vpack.c.bf16 %v422, %v422
    %v455 = vpack.c.bf16 %v423, %v423
    %v456 = vpack.c.bf16 %v424, %v424
    %v457 = vpack.c.bf16 %v425, %v425
    %v458 = vpack.c.bf16 %v426, %v426
    %v459 = vpack.c.bf16 %v427, %v427
    %v460 = vpack.c.bf16 %v428, %v428
    %v461 = vpack.c.bf16 %v429, %v429
    %v462 = vpack.c.bf16 %v430, %v430
    %v463 = vpack.c.bf16 %v431, %v431
    %v464 = vpack.c.bf16 %v432, %v432
    %v465 = vpack.c.bf16 %v433, %v433
    %v466 = vpack.c.bf16 %v434, %v434
    %v467 = vpack.c.bf16 %v435, %v435
    %v468 = vpack.c.bf16 %v436, %v436
    %v469 = vpack.c.bf16 %v437, %v437
    %v470 = vpack.c.bf16 %v438, %v438
    %v471 = vpack.c.bf16 %v439, %v439
    %v472 = vpack.c.bf16 %v440, %v440
    %v473 = vpack.c.bf16 %v441, %v441
    %v474 = vpack.c.bf16 %v442, %v442
    %v475 = vpack.c.bf16 %v443, %v443
    %v476 = vpack.c.bf16 %v444, %v444
    %v477 = vpack.c.bf16 %v445, %v445
    %v478 = vpack.c.bf16 %v446, %v446
    %v479 = vunpack.c.l.bf16 %v447
    %v480 = vunpack.c.l.bf16 %v448
    %v481 = vunpack.c.l.bf16 %v449
    %v482 = vunpack.c.l.bf16 %v450
    %v483 = vunpack.c.l.bf16 %v451
    %v484 = vunpack.c.l.bf16 %v452
    %v485 = vunpack.c.l.bf16 %v453
    %v486 = vunpack.c.l.bf16 %v454
    %v487 = vunpack.c.l.bf16 %v455
    %v488 = vunpack.c.l.bf16 %v456
    %v489 = vunpack.c.l.bf16 %v457
    %v490 = vunpack.c.l.bf16 %v458
    %v491 = vunpack.c.l.bf16 %v459
    %v492 = vunpack.c.l.bf16 %v460
    %v493 = vunpack.c.l.bf16 %v461
    %v494 = vunpack.c.l.bf16 %v462
    %v495 = vunpack.c.l.bf16 %v463
    %v496 = vunpack.c.l.bf16 %v464
    %v497 = vunpack.c.l.bf16 %v465
    %v498 = vunpack.c.l.bf16 %v466
    %v499 = vunpack.c.l.bf16 %v467
    %v500 = vunpack.c.l.bf16 %v468
    %v501 = vunpack.c.l.bf16 %v469
    %v502 = vunpack.c.l.bf16 %v470
    %v503 = vunpack.c.l.bf16 %v471
    %v504 = vunpack.c.l.bf16 %v472
    %v505 = vunpack.c.l.bf16 %v473
    %v506 = vunpack.c.l.bf16 %v474
    %v507 = vunpack.c.l.bf16 %v475
    %v508 = vunpack.c.l.bf16 %v476
    %v509 = vunpack.c.l.bf16 %v477
    %v510 = vunpack.c.l.bf16 %v478
    %v511 = vperm.slane %v99, 4
    %v512 = vmul.f32 %v479, %v511
    %v513 = vmul.f32 %v480, %v511
    %v514 = vmul.f32 %v481, %v511
    %v515 = vmul.f32 %v482, %v511
    %v516 = vmul.f32 %v483, %v511
    %v517 = vmul.f32 %v484, %v511
    %v518 = vmul.f32 %v485, %v511
    %v519 = vmul.f32 %v486, %v511
    %v520 = vmul.f32 %v487, %v511
    %v521 = vmul.f32 %v488, %v511
    %v522 = vmul.f32 %v489, %v511
    %v523 = vmul.f32 %v490, %v511
    %v524 = vmul.f32 %v491, %v511
    %v525 = vmul.f32 %v492, %v511
    %v526 = vmul.f32 %v493, %v511
    %v527 = vmul.f32 %v494, %v511
    %v528 = vmul.f32 %v495, %v511
    %v529 = vmul.f32 %v496, %v511
    %v530 = vmul.f32 %v497, %v511
    %v531 = vmul.f32 %v498, %v511
    %v532 = vmul.f32 %v499, %v511
    %v533 = vmul.f32 %v500, %v511
    %v534 = vmul.f32 %v501, %v511
    %v535 = vmul.f32 %v502, %v511
    %v536 = vmul.f32 %v503, %v511
    %v537 = vmul.f32 %v504, %v511
    %v538 = vmul.f32 %v505, %v511
    %v539 = vmul.f32 %v506, %v511
    %v540 = vmul.f32 %v507, %v511
    %v541 = vmul.f32 %v508, %v511
    %v542 = vmul.f32 %v509, %v511
    %v543 = vmul.f32 %v510, %v511
    %v544 = vperm.slane %v99, 7
    %v545 = vadd.f32 %v512, %v544
    %v546 = vadd.f32 %v513, %v544
    %v547 = vadd.f32 %v514, %v544
    %v548 = vadd.f32 %v515, %v544
    %v549 = vadd.f32 %v516, %v544
    %v550 = vadd.f32 %v517, %v544
    %v551 = vadd.f32 %v518, %v544
    %v552 = vadd.f32 %v519, %v544
    %v553 = vadd.f32 %v520, %v544
    %v554 = vadd.f32 %v521, %v544
    %v555 = vadd.f32 %v522, %v544
    %v556 = vadd.f32 %v523, %v544
    %v557 = vadd.f32 %v524, %v544
    %v558 = vadd.f32 %v525, %v544
    %v559 = vadd.f32 %v526, %v544
    %v560 = vadd.f32 %v527, %v544
    %v561 = vadd.f32 %v528, %v544
    %v562 = vadd.f32 %v529, %v544
    %v563 = vadd.f32 %v530, %v544
    %v564 = vadd.f32 %v531, %v544
    %v565 = vadd.f32 %v532, %v544
    %v566 = vadd.f32 %v533, %v544
    %v567 = vadd.f32 %v534, %v544
    %v568 = vadd.f32 %v535, %v544
    %v569 = vadd.f32 %v536, %v544
    %v570 = vadd.f32 %v537, %v544
    %v571 = vadd.f32 %v538, %v544
    %v572 = vadd.f32 %v539, %v544
    %v573 = vadd.f32 %v540, %v544
    %v574 = vadd.f32 %v541, %v544
    %v575 = vadd.f32 %v542, %v544
    %v576 = vadd.f32 %v543, %v544
    %v577 = vpack.c.bf16 %v546, %v545
    %v578 = vpack.c.bf16 %v548, %v547
    %v579 = vpack.c.bf16 %v550, %v549
    %v580 = vpack.c.bf16 %v552, %v551
    %v581 = vpack.c.bf16 %v554, %v553
    %v582 = vpack.c.bf16 %v556, %v555
    %v583 = vpack.c.bf16 %v558, %v557
    %v584 = vpack.c.bf16 %v560, %v559
    %v585 = vpack.c.bf16 %v562, %v561
    %v586 = vpack.c.bf16 %v564, %v563
    %v587 = vpack.c.bf16 %v566, %v565
    %v588 = vpack.c.bf16 %v568, %v567
    %v589 = vpack.c.bf16 %v570, %v569
    %v590 = vpack.c.bf16 %v572, %v571
    %v591 = vpack.c.bf16 %v574, %v573
    %v592 = vpack.c.bf16 %v576, %v575
    %v625 = vunpack.c.l.b16 %v101
    %v626 = vunpack.c.h.b16 %v101
    %v627 = vunpack.c.l.b16 %v102
    %v628 = vunpack.c.h.b16 %v102
    %v629 = vunpack.c.l.b16 %v103
    %v630 = vunpack.c.h.b16 %v103
    %v631 = vunpack.c.l.b16 %v104
    %v632 = vunpack.c.h.b16 %v104
    %v633 = vunpack.c.l.b16 %v105
    %v634 = vunpack.c.h.b16 %v105
    %v635 = vunpack.c.l.b16 %v106
    %v636 = vunpack.c.h.b16 %v106
    %v637 = vunpack.c.l.b16 %v107
    %v638 = vunpack.c.h.b16 %v107
    %v639 = vunpack.c.l.b16 %v108
    %v640 = vunpack.c.h.b16 %v108
    %v641 = vunpack.c.l.b16 %v109
    %v642 = vunpack.c.h.b16 %v109
    %v643 = vunpack.c.l.b16 %v110
    %v644 = vunpack.c.h.b16 %v110
    %v645 = vunpack.c.l.b16 %v111
    %v646 = vunpack.c.h.b16 %v111
    %v647 = vunpack.c.l.b16 %v112
    %v648 = vunpack.c.h.b16 %v112
    %v649 = vunpack.c.l.b16 %v113
    %v650 = vunpack.c.h.b16 %v113
    %v651 = vunpack.c.l.b16 %v114
    %v652 = vunpack.c.h.b16 %v114
    %v653 = vunpack.c.l.b16 %v115
    %v654 = vunpack.c.h.b16 %v115
    %v655 = vunpack.c.l.b16 %v116
    %v656 = vunpack.c.h.b16 %v116
    %v657 = vunpack.c.l.b16 %v117
    %v658 = vunpack.c.h.b16 %v117
    %v659 = vunpack.c.l.b16 %v118
    %v660 = vunpack.c.h.b16 %v118
    %v661 = vunpack.c.l.b16 %v119
    %v662 = vunpack.c.h.b16 %v119
    %v663 = vunpack.c.l.b16 %v120
    %v664 = vunpack.c.h.b16 %v120
    %v665 = vunpack.c.l.b16 %v121
    %v666 = vunpack.c.h.b16 %v121
    %v667 = vunpack.c.l.b16 %v122
    %v668 = vunpack.c.h.b16 %v122
    %v669 = vunpack.c.l.b16 %v123
    %v670 = vunpack.c.h.b16 %v123
    %v671 = vunpack.c.l.b16 %v124
    %v672 = vunpack.c.h.b16 %v124
    %v673 = vunpack.c.l.b16 %v125
    %v674 = vunpack.c.h.b16 %v125
    %v675 = vunpack.c.l.b16 %v126
    %v676 = vunpack.c.h.b16 %v126
    %v677 = vunpack.c.l.b16 %v127
    %v678 = vunpack.c.h.b16 %v127
    %v679 = vunpack.c.l.b16 %v128
    %v680 = vunpack.c.h.b16 %v128
    %v681 = vunpack.c.l.b16 %v129
    %v682 = vunpack.c.h.b16 %v129
    %v683 = vunpack.c.l.b16 %v130
    %v684 = vunpack.c.h.b16 %v130
    %v685 = vunpack.c.l.b16 %v131
    %v686 = vunpack.c.h.b16 %v131
    %v687 = vunpack.c.l.b16 %v132
    %v688 = vunpack.c.h.b16 %v132
    %v689 = vpack.c.b16 %v627, %v625
    %v690 = vpack.c.b16 %v628, %v626
    %v691 = vpack.c.b16 %v631, %v629
    %v692 = vpack.c.b16 %v632, %v630
    %v693 = vpack.c.b16 %v635, %v633
    %v694 = vpack.c.b16 %v636, %v634
    %v695 = vpack.c.b16 %v639, %v637
    %v696 = vpack.c.b16 %v640, %v638
    %v697 = vpack.c.b16 %v643, %v641
    %v698 = vpack.c.b16 %v644, %v642
    %v699 = vpack.c.b16 %v647, %v645
    %v700 = vpack.c.b16 %v648, %v646
    %v701 = vpack.c.b16 %v651, %v649
    %v702 = vpack.c.b16 %v652, %v650
    %v703 = vpack.c.b16 %v655, %v653
    %v704 = vpack.c.b16 %v656, %v654
    %v705 = vpack.c.b16 %v659, %v657
    %v706 = vpack.c.b16 %v660, %v658
    %v707 = vpack.c.b16 %v663, %v661
    %v708 = vpack.c.b16 %v664, %v662
    %v709 = vpack.c.b16 %v667, %v665
    %v710 = vpack.c.b16 %v668, %v666
    %v711 = vpack.c.b16 %v671, %v669
    %v712 = vpack.c.b16 %v672, %v670
    %v713 = vpack.c.b16 %v675, %v673
    %v714 = vpack.c.b16 %v676, %v674
    %v715 = vpack.c.b16 %v679, %v677
    %v716 = vpack.c.b16 %v680, %v678
    %v717 = vpack.c.b16 %v683, %v681
    %v718 = vpack.c.b16 %v684, %v682
    %v719 = vpack.c.b16 %v687, %v685
    %v720 = vpack.c.b16 %v688, %v686
    %753 = vmatpush.bf16.msra.mxu0 %v584
    %754 = vmatpush.bf16.msra.mxu0 %v583
    %755 = vmatpush.bf16.msra.mxu0 %v582
    %756 = vmatpush.bf16.msra.mxu0 %v581
    %757 = vmatpush.bf16.msra.mxu0 %v580
    %758 = vmatpush.bf16.msra.mxu0 %v579
    %759 = vmatpush.bf16.msra.mxu0 %v578
    %760 = vmatpush.bf16.msra.mxu0 %v577
    %761 = vmatmul.bf16.gmra.mxu0 %v689
    %v762 = vpop.f32.mrf.mxu0
    %v763 = vadd.f32 0.0, %v762
    %v764 = vpop.f32.mrf.mxu0
    %v765 = vadd.f32 0.0, %v764
    %766 = vmatmul.bf16.gmra.mxu0 %v691
    %v767 = vpop.f32.mrf.mxu0
    %v768 = vadd.f32 0.0, %v767
    %v769 = vpop.f32.mrf.mxu0
    %v770 = vadd.f32 0.0, %v769
    %771 = vmatmul.bf16.gmra.mxu0 %v693
    %v772 = vpop.f32.mrf.mxu0
    %v773 = vadd.f32 0.0, %v772
    %v774 = vpop.f32.mrf.mxu0
    %v775 = vadd.f32 0.0, %v774
    %776 = vmatmul.bf16.gmra.mxu0 %v695
    %v777 = vpop.f32.mrf.mxu0
    %v778 = vadd.f32 0.0, %v777
    %v779 = vpop.f32.mrf.mxu0
    %v780 = vadd.f32 0.0, %v779
    %781 = vmatmul.bf16.gmra.mxu0 %v697
    %v782 = vpop.f32.mrf.mxu0
    %v783 = vadd.f32 0.0, %v782
    %v784 = vpop.f32.mrf.mxu0
    %v785 = vadd.f32 0.0, %v784
    %786 = vmatmul.bf16.gmra.mxu0 %v699
    %v787 = vpop.f32.mrf.mxu0
    %v788 = vadd.f32 0.0, %v787
    %v789 = vpop.f32.mrf.mxu0
    %v790 = vadd.f32 0.0, %v789
    %791 = vmatmul.bf16.gmra.mxu0 %v701
    %v792 = vpop.f32.mrf.mxu0
    %v793 = vadd.f32 0.0, %v792
    %v794 = vpop.f32.mrf.mxu0
    %v795 = vadd.f32 0.0, %v794
    %796 = vmatmul.bf16.gmra.mxu0 %v703
    %v797 = vpop.f32.mrf.mxu0
    %v798 = vadd.f32 0.0, %v797
    %v799 = vpop.f32.mrf.mxu0
    %v800 = vadd.f32 0.0, %v799
    %801 = vmatmul.bf16.gmra.mxu0 %v705
    %v802 = vpop.f32.mrf.mxu0
    %v803 = vadd.f32 0.0, %v802
    %v804 = vpop.f32.mrf.mxu0
    %v805 = vadd.f32 0.0, %v804
    %806 = vmatmul.bf16.gmra.mxu0 %v707
    %v807 = vpop.f32.mrf.mxu0
    %v808 = vadd.f32 0.0, %v807
    %v809 = vpop.f32.mrf.mxu0
    %v810 = vadd.f32 0.0, %v809
    %811 = vmatmul.bf16.gmra.mxu0 %v709
    %v812 = vpop.f32.mrf.mxu0
    %v813 = vadd.f32 0.0, %v812
    %v814 = vpop.f32.mrf.mxu0
    %v815 = vadd.f32 0.0, %v814
    %816 = vmatmul.bf16.gmra.mxu0 %v711
    %v817 = vpop.f32.mrf.mxu0
    %v818 = vadd.f32 0.0, %v817
    %v819 = vpop.f32.mrf.mxu0
    %v820 = vadd.f32 0.0, %v819
    %821 = vmatmul.bf16.gmra.mxu0 %v713
    %v822 = vpop.f32.mrf.mxu0
    %v823 = vadd.f32 0.0, %v822
    %v824 = vpop.f32.mrf.mxu0
    %v825 = vadd.f32 0.0, %v824
    %826 = vmatmul.bf16.gmra.mxu0 %v715
    %v827 = vpop.f32.mrf.mxu0
    %v828 = vadd.f32 0.0, %v827
    %v829 = vpop.f32.mrf.mxu0
    %v830 = vadd.f32 0.0, %v829
    %831 = vmatmul.bf16.gmra.mxu0 %v717
    %v832 = vpop.f32.mrf.mxu0
    %v833 = vadd.f32 0.0, %v832
    %v834 = vpop.f32.mrf.mxu0
    %v835 = vadd.f32 0.0, %v834
    %836 = vmatmul.bf16.gmra.mxu0 %v719
    %v837 = vpop.f32.mrf.mxu0
    %v838 = vadd.f32 0.0, %v837
    %v839 = vpop.f32.mrf.mxu0
    %v840 = vadd.f32 0.0, %v839
    %841 = vdwg.mxu0
    %842 = vmatpush.bf16.msra.mxu0 %v592
    %843 = vmatpush.bf16.msra.mxu0 %v591
    %844 = vmatpush.bf16.msra.mxu0 %v590
    %845 = vmatpush.bf16.msra.mxu0 %v589
    %846 = vmatpush.bf16.msra.mxu0 %v588
    %847 = vmatpush.bf16.msra.mxu0 %v587
    %848 = vmatpush.bf16.msra.mxu0 %v586
    %849 = vmatpush.bf16.msra.mxu0 %v585
    %850 = vmatmul.bf16.gmra.mxu0 %v690
    %v851 = vpop.f32.mrf.mxu0
    %v852 = vadd.f32 %v763, %v851
    %v853 = vpop.f32.mrf.mxu0
    %v854 = vadd.f32 %v765, %v853
    %855 = vmatmul.bf16.gmra.mxu0 %v692
    %v856 = vpop.f32.mrf.mxu0
    %v857 = vadd.f32 %v768, %v856
    %v858 = vpop.f32.mrf.mxu0
    %v859 = vadd.f32 %v770, %v858
    %860 = vmatmul.bf16.gmra.mxu0 %v694
    %v861 = vpop.f32.mrf.mxu0
    %v862 = vadd.f32 %v773, %v861
    %v863 = vpop.f32.mrf.mxu0
    %v864 = vadd.f32 %v775, %v863
    %865 = vmatmul.bf16.gmra.mxu0 %v696
    %v866 = vpop.f32.mrf.mxu0
    %v867 = vadd.f32 %v778, %v866
    %v868 = vpop.f32.mrf.mxu0
    %v869 = vadd.f32 %v780, %v868
    %870 = vmatmul.bf16.gmra.mxu0 %v698
    %v871 = vpop.f32.mrf.mxu0
    %v872 = vadd.f32 %v783, %v871
    %v873 = vpop.f32.mrf.mxu0
    %v874 = vadd.f32 %v785, %v873
    %875 = vmatmul.bf16.gmra.mxu0 %v700
    %v876 = vpop.f32.mrf.mxu0
    %v877 = vadd.f32 %v788, %v876
    %v878 = vpop.f32.mrf.mxu0
    %v879 = vadd.f32 %v790, %v878
    %880 = vmatmul.bf16.gmra.mxu0 %v702
    %v881 = vpop.f32.mrf.mxu0
    %v882 = vadd.f32 %v793, %v881
    %v883 = vpop.f32.mrf.mxu0
    %v884 = vadd.f32 %v795, %v883
    %885 = vmatmul.bf16.gmra.mxu0 %v704
    %v886 = vpop.f32.mrf.mxu0
    %v887 = vadd.f32 %v798, %v886
    %v888 = vpop.f32.mrf.mxu0
    %v889 = vadd.f32 %v800, %v888
    %890 = vmatmul.bf16.gmra.mxu0 %v706
    %v891 = vpop.f32.mrf.mxu0
    %v892 = vadd.f32 %v803, %v891
    %v893 = vpop.f32.mrf.mxu0
    %v894 = vadd.f32 %v805, %v893
    %895 = vmatmul.bf16.gmra.mxu0 %v708
    %v896 = vpop.f32.mrf.mxu0
    %v897 = vadd.f32 %v808, %v896
    %v898 = vpop.f32.mrf.mxu0
    %v899 = vadd.f32 %v810, %v898
    %900 = vmatmul.bf16.gmra.mxu0 %v710
    %v901 = vpop.f32.mrf.mxu0
    %v902 = vadd.f32 %v813, %v901
    %v903 = vpop.f32.mrf.mxu0
    %v904 = vadd.f32 %v815, %v903
    %905 = vmatmul.bf16.gmra.mxu0 %v712
    %v906 = vpop.f32.mrf.mxu0
    %v907 = vadd.f32 %v818, %v906
    %v908 = vpop.f32.mrf.mxu0
    %v909 = vadd.f32 %v820, %v908
    %910 = vmatmul.bf16.gmra.mxu0 %v714
    %v911 = vpop.f32.mrf.mxu0
    %v912 = vadd.f32 %v823, %v911
    %v913 = vpop.f32.mrf.mxu0
    %v914 = vadd.f32 %v825, %v913
    %915 = vmatmul.bf16.gmra.mxu0 %v716
    %v916 = vpop.f32.mrf.mxu0
    %v917 = vadd.f32 %v828, %v916
    %v918 = vpop.f32.mrf.mxu0
    %v919 = vadd.f32 %v830, %v918
    %920 = vmatmul.bf16.gmra.mxu0 %v718
    %v921 = vpop.f32.mrf.mxu0
    %v922 = vadd.f32 %v833, %v921
    %v923 = vpop.f32.mrf.mxu0
    %v924 = vadd.f32 %v835, %v923
    %925 = vmatmul.bf16.gmra.mxu0 %v720
    %v926 = vpop.f32.mrf.mxu0
    %v927 = vadd.f32 %v838, %v926
    %v928 = vpop.f32.mrf.mxu0
    %v929 = vadd.f32 %v840, %v928
    %930 = vdwg.mxu0
    %v931 = vpack.c.bf16 %v854, %v852
    %v932 = vpack.c.bf16 %v859, %v857
    %v933 = vpack.c.bf16 %v864, %v862
    %v934 = vpack.c.bf16 %v869, %v867
    %v935 = vpack.c.bf16 %v874, %v872
    %v936 = vpack.c.bf16 %v879, %v877
    %v937 = vpack.c.bf16 %v884, %v882
    %v938 = vpack.c.bf16 %v889, %v887
    %v939 = vpack.c.bf16 %v894, %v892
    %v940 = vpack.c.bf16 %v899, %v897
    %v941 = vpack.c.bf16 %v904, %v902
    %v942 = vpack.c.bf16 %v909, %v907
    %v943 = vpack.c.bf16 %v914, %v912
    %v944 = vpack.c.bf16 %v919, %v917
    %v945 = vpack.c.bf16 %v924, %v922
    %v946 = vpack.c.bf16 %v929, %v927
    %s947 = scalar_lea.vmem [#allocation8], 64
    %v948 = vld [vmem:[%s947] sm:$0xf]
    %v949 = vld [vmem:[%s947 + $0x4] sm:$0xf]
    %v950 = vld [vmem:[%s947 + $0x8] sm:$0xf]
    %v951 = vld [vmem:[%s947 + $0xc] sm:$0xf]
    %v952 = vld [vmem:[%s947 + $0x10] sm:$0xf]
    %v953 = vld [vmem:[%s947 + $0x14] sm:$0xf]
    %v954 = vld [vmem:[%s947 + $0x18] sm:$0xf]
    %v955 = vld [vmem:[%s947 + $0x1c] sm:$0xf]
    %v956 = vld [vmem:[%s947 + $0x20] sm:$0xf]
    %v957 = vld [vmem:[%s947 + $0x24] sm:$0xf]
    %v958 = vld [vmem:[%s947 + $0x28] sm:$0xf]
    %v959 = vld [vmem:[%s947 + $0x2c] sm:$0xf]
    %v960 = vld [vmem:[%s947 + $0x30] sm:$0xf]
    %v961 = vld [vmem:[%s947 + $0x34] sm:$0xf]
    %v962 = vld [vmem:[%s947 + $0x38] sm:$0xf]
    %v963 = vld [vmem:[%s947 + $0x3c] sm:$0xf]
    %v964 = vperm.slane %v100, 2
    %v981 = vunpack.c.l.b16 %v948
    %v982 = vunpack.c.l.b16 %v949
    %v983 = vunpack.c.l.b16 %v950
    %v984 = vunpack.c.l.b16 %v951
    %v985 = vunpack.c.l.b16 %v952
    %v986 = vunpack.c.l.b16 %v953
    %v987 = vunpack.c.l.b16 %v954
    %v988 = vunpack.c.l.b16 %v955
    %v989 = vunpack.c.l.b16 %v956
    %v990 = vunpack.c.l.b16 %v957
    %v991 = vunpack.c.l.b16 %v958
    %v992 = vunpack.c.l.b16 %v959
    %v993 = vunpack.c.l.b16 %v960
    %v994 = vunpack.c.l.b16 %v961
    %v995 = vunpack.c.l.b16 %v962
    %v996 = vunpack.c.l.b16 %v963
    %v997 = vpack.c.b16 %v982, %v981
    %v998 = vpack.c.b16 %v984, %v983
    %v999 = vpack.c.b16 %v986, %v985
    %v1000 = vpack.c.b16 %v988, %v987
    %v1001 = vpack.c.b16 %v990, %v989
    %v1002 = vpack.c.b16 %v992, %v991
    %v1003 = vpack.c.b16 %v994, %v993
    %v1004 = vpack.c.b16 %v996, %v995
    %1013 = vmatpush.bf16.msra.mxu0 %v1004
    %1014 = vmatpush.bf16.msra.mxu0 %v1003
    %1015 = vmatpush.bf16.msra.mxu0 %v1002
    %1016 = vmatpush.bf16.msra.mxu0 %v1001
    %1017 = vmatpush.bf16.msra.mxu0 %v1000
    %1018 = vmatpush.bf16.msra.mxu0 %v999
    %1019 = vmatpush.bf16.msra.mxu0 %v998
    %1020 = vmatpush.bf16.msra.mxu0 %v997
    %1021 = vmatmul.bf16.gmra.mxu0 %v931
    %v1022 = vpop.f32.mrf.mxu0
    %v1023 = vadd.f32 %v964, %v1022
    %v1024 = vpop.f32.mrf.mxu0
    %v1025 = vadd.f32 %v964, %v1024
    %1026 = vmatmul.bf16.gmra.mxu0 %v932
    %v1027 = vpop.f32.mrf.mxu0
    %v1028 = vadd.f32 %v964, %v1027
    %v1029 = vpop.f32.mrf.mxu0
    %v1030 = vadd.f32 %v964, %v1029
    %1031 = vmatmul.bf16.gmra.mxu0 %v933
    %v1032 = vpop.f32.mrf.mxu0
    %v1033 = vadd.f32 %v964, %v1032
    %v1034 = vpop.f32.mrf.mxu0
    %v1035 = vadd.f32 %v964, %v1034
    %1036 = vmatmul.bf16.gmra.mxu0 %v934
    %v1037 = vpop.f32.mrf.mxu0
    %v1038 = vadd.f32 %v964, %v1037
    %v1039 = vpop.f32.mrf.mxu0
    %v1040 = vadd.f32 %v964, %v1039
    %1041 = vmatmul.bf16.gmra.mxu0 %v935
    %v1042 = vpop.f32.mrf.mxu0
    %v1043 = vadd.f32 %v964, %v1042
    %v1044 = vpop.f32.mrf.mxu0
    %v1045 = vadd.f32 %v964, %v1044
    %1046 = vmatmul.bf16.gmra.mxu0 %v936
    %v1047 = vpop.f32.mrf.mxu0
    %v1048 = vadd.f32 %v964, %v1047
    %v1049 = vpop.f32.mrf.mxu0
    %v1050 = vadd.f32 %v964, %v1049
    %1051 = vmatmul.bf16.gmra.mxu0 %v937
    %v1052 = vpop.f32.mrf.mxu0
    %v1053 = vadd.f32 %v964, %v1052
    %v1054 = vpop.f32.mrf.mxu0
    %v1055 = vadd.f32 %v964, %v1054
    %1056 = vmatmul.bf16.gmra.mxu0 %v938
    %v1057 = vpop.f32.mrf.mxu0
    %v1058 = vadd.f32 %v964, %v1057
    %v1059 = vpop.f32.mrf.mxu0
    %v1060 = vadd.f32 %v964, %v1059
    %1061 = vmatmul.bf16.gmra.mxu0 %v939
    %v1062 = vpop.f32.mrf.mxu0
    %v1063 = vadd.f32 %v964, %v1062
    %v1064 = vpop.f32.mrf.mxu0
    %v1065 = vadd.f32 %v964, %v1064
    %1066 = vmatmul.bf16.gmra.mxu0 %v940
    %v1067 = vpop.f32.mrf.mxu0
    %v1068 = vadd.f32 %v964, %v1067
    %v1069 = vpop.f32.mrf.mxu0
    %v1070 = vadd.f32 %v964, %v1069
    %1071 = vmatmul.bf16.gmra.mxu0 %v941
    %v1072 = vpop.f32.mrf.mxu0
    %v1073 = vadd.f32 %v964, %v1072
    %v1074 = vpop.f32.mrf.mxu0
    %v1075 = vadd.f32 %v964, %v1074
    %1076 = vmatmul.bf16.gmra.mxu0 %v942
    %v1077 = vpop.f32.mrf.mxu0
    %v1078 = vadd.f32 %v964, %v1077
    %v1079 = vpop.f32.mrf.mxu0
    %v1080 = vadd.f32 %v964, %v1079
    %1081 = vmatmul.bf16.gmra.mxu0 %v943
    %v1082 = vpop.f32.mrf.mxu0
    %v1083 = vadd.f32 %v964, %v1082
    %v1084 = vpop.f32.mrf.mxu0
    %v1085 = vadd.f32 %v964, %v1084
    %1086 = vmatmul.bf16.gmra.mxu0 %v944
    %v1087 = vpop.f32.mrf.mxu0
    %v1088 = vadd.f32 %v964, %v1087
    %v1089 = vpop.f32.mrf.mxu0
    %v1090 = vadd.f32 %v964, %v1089
    %1091 = vmatmul.bf16.gmra.mxu0 %v945
    %v1092 = vpop.f32.mrf.mxu0
    %v1093 = vadd.f32 %v964, %v1092
    %v1094 = vpop.f32.mrf.mxu0
    %v1095 = vadd.f32 %v964, %v1094
    %1096 = vmatmul.bf16.gmra.mxu0 %v946
    %v1097 = vpop.f32.mrf.mxu0
    %v1098 = vadd.f32 %v964, %v1097
    %v1099 = vpop.f32.mrf.mxu0
    %v1100 = vadd.f32 %v964, %v1099
    %1101 = vdwg.mxu0
    %v1102 = vmax.f32 %v1023, 0.0
    %v1103 = vmax.f32 %v1025, 0.0
    %v1104 = vmax.f32 %v1028, 0.0
    %v1105 = vmax.f32 %v1030, 0.0
    %v1106 = vmax.f32 %v1033, 0.0
    %v1107 = vmax.f32 %v1035, 0.0
    %v1108 = vmax.f32 %v1038, 0.0
    %v1109 = vmax.f32 %v1040, 0.0
    %v1110 = vmax.f32 %v1043, 0.0
    %v1111 = vmax.f32 %v1045, 0.0
    %v1112 = vmax.f32 %v1048, 0.0
    %v1113 = vmax.f32 %v1050, 0.0
    %v1114 = vmax.f32 %v1053, 0.0
    %v1115 = vmax.f32 %v1055, 0.0
    %v1116 = vmax.f32 %v1058, 0.0
    %v1117 = vmax.f32 %v1060, 0.0
    %v1118 = vmax.f32 %v1063, 0.0
    %v1119 = vmax.f32 %v1065, 0.0
    %v1120 = vmax.f32 %v1068, 0.0
    %v1121 = vmax.f32 %v1070, 0.0
    %v1122 = vmax.f32 %v1073, 0.0
    %v1123 = vmax.f32 %v1075, 0.0
    %v1124 = vmax.f32 %v1078, 0.0
    %v1125 = vmax.f32 %v1080, 0.0
    %v1126 = vmax.f32 %v1083, 0.0
    %v1127 = vmax.f32 %v1085, 0.0
    %v1128 = vmax.f32 %v1088, 0.0
    %v1129 = vmax.f32 %v1090, 0.0
    %v1130 = vmax.f32 %v1093, 0.0
    %v1131 = vmax.f32 %v1095, 0.0
    %v1132 = vmax.f32 %v1098, 0.0
    %v1133 = vmax.f32 %v1100, 0.0
    %v1134 = vpack.c.bf16 %v1102, %v1102
    %v1135 = vpack.c.bf16 %v1103, %v1103
    %v1136 = vpack.c.bf16 %v1104, %v1104
    %v1137 = vpack.c.bf16 %v1105, %v1105
    %v1138 = vpack.c.bf16 %v1106, %v1106
    %v1139 = vpack.c.bf16 %v1107, %v1107
    %v1140 = vpack.c.bf16 %v1108, %v1108
    %v1141 = vpack.c.bf16 %v1109, %v1109
    %v1142 = vpack.c.bf16 %v1110, %v1110
    %v1143 = vpack.c.bf16 %v1111, %v1111
    %v1144 = vpack.c.bf16 %v1112, %v1112
    %v1145 = vpack.c.bf16 %v1113, %v1113
    %v1146 = vpack.c.bf16 %v1114, %v1114
    %v1147 = vpack.c.bf16 %v1115, %v1115
    %v1148 = vpack.c.bf16 %v1116, %v1116
    %v1149 = vpack.c.bf16 %v1117, %v1117
    %v1150 = vpack.c.bf16 %v1118, %v1118
    %v1151 = vpack.c.bf16 %v1119, %v1119
    %v1152 = vpack.c.bf16 %v1120, %v1120
    %v1153 = vpack.c.bf16 %v1121, %v1121
    %v1154 = vpack.c.bf16 %v1122, %v1122
    %v1155 = vpack.c.bf16 %v1123, %v1123
    %v1156 = vpack.c.bf16 %v1124, %v1124
    %v1157 = vpack.c.bf16 %v1125, %v1125
    %v1158 = vpack.c.bf16 %v1126, %v1126
    %v1159 = vpack.c.bf16 %v1127, %v1127
    %v1160 = vpack.c.bf16 %v1128, %v1128
    %v1161 = vpack.c.bf16 %v1129, %v1129
    %v1162 = vpack.c.bf16 %v1130, %v1130
    %v1163 = vpack.c.bf16 %v1131, %v1131
    %v1164 = vpack.c.bf16 %v1132, %v1132
    %v1165 = vpack.c.bf16 %v1133, %v1133
    %v1166 = vunpack.c.l.bf16 %v1134
    %v1167 = vunpack.c.l.bf16 %v1135
    %v1168 = vunpack.c.l.bf16 %v1136
    %v1169 = vunpack.c.l.bf16 %v1137
    %v1170 = vunpack.c.l.bf16 %v1138
    %v1171 = vunpack.c.l.bf16 %v1139
    %v1172 = vunpack.c.l.bf16 %v1140
    %v1173 = vunpack.c.l.bf16 %v1141
    %v1174 = vunpack.c.l.bf16 %v1142
    %v1175 = vunpack.c.l.bf16 %v1143
    %v1176 = vunpack.c.l.bf16 %v1144
    %v1177 = vunpack.c.l.bf16 %v1145
    %v1178 = vunpack.c.l.bf16 %v1146
    %v1179 = vunpack.c.l.bf16 %v1147
    %v1180 = vunpack.c.l.bf16 %v1148
    %v1181 = vunpack.c.l.bf16 %v1149
    %v1182 = vunpack.c.l.bf16 %v1150
    %v1183 = vunpack.c.l.bf16 %v1151
    %v1184 = vunpack.c.l.bf16 %v1152
    %v1185 = vunpack.c.l.bf16 %v1153
    %v1186 = vunpack.c.l.bf16 %v1154
    %v1187 = vunpack.c.l.bf16 %v1155
    %v1188 = vunpack.c.l.bf16 %v1156
    %v1189 = vunpack.c.l.bf16 %v1157
    %v1190 = vunpack.c.l.bf16 %v1158
    %v1191 = vunpack.c.l.bf16 %v1159
    %v1192 = vunpack.c.l.bf16 %v1160
    %v1193 = vunpack.c.l.bf16 %v1161
    %v1194 = vunpack.c.l.bf16 %v1162
    %v1195 = vunpack.c.l.bf16 %v1163
    %v1196 = vunpack.c.l.bf16 %v1164
    %v1197 = vunpack.c.l.bf16 %v1165
    %v1198 = vperm.slane %v99, 5
    %v1199 = vmul.f32 %v1166, %v1198
    %v1200 = vmul.f32 %v1167, %v1198
    %v1201 = vmul.f32 %v1168, %v1198
    %v1202 = vmul.f32 %v1169, %v1198
    %v1203 = vmul.f32 %v1170, %v1198
    %v1204 = vmul.f32 %v1171, %v1198
    %v1205 = vmul.f32 %v1172, %v1198
    %v1206 = vmul.f32 %v1173, %v1198
    %v1207 = vmul.f32 %v1174, %v1198
    %v1208 = vmul.f32 %v1175, %v1198
    %v1209 = vmul.f32 %v1176, %v1198
    %v1210 = vmul.f32 %v1177, %v1198
    %v1211 = vmul.f32 %v1178, %v1198
    %v1212 = vmul.f32 %v1179, %v1198
    %v1213 = vmul.f32 %v1180, %v1198
    %v1214 = vmul.f32 %v1181, %v1198
    %v1215 = vmul.f32 %v1182, %v1198
    %v1216 = vmul.f32 %v1183, %v1198
    %v1217 = vmul.f32 %v1184, %v1198
    %v1218 = vmul.f32 %v1185, %v1198
    %v1219 = vmul.f32 %v1186, %v1198
    %v1220 = vmul.f32 %v1187, %v1198
    %v1221 = vmul.f32 %v1188, %v1198
    %v1222 = vmul.f32 %v1189, %v1198
    %v1223 = vmul.f32 %v1190, %v1198
    %v1224 = vmul.f32 %v1191, %v1198
    %v1225 = vmul.f32 %v1192, %v1198
    %v1226 = vmul.f32 %v1193, %v1198
    %v1227 = vmul.f32 %v1194, %v1198
    %v1228 = vmul.f32 %v1195, %v1198
    %v1229 = vmul.f32 %v1196, %v1198
    %v1230 = vmul.f32 %v1197, %v1198
    %v1231 = vperm.slane %v100, 0
    %v1232 = vadd.f32 %v1199, %v1231
    %v1233 = vadd.f32 %v1200, %v1231
    %v1234 = vadd.f32 %v1201, %v1231
    %v1235 = vadd.f32 %v1202, %v1231
    %v1236 = vadd.f32 %v1203, %v1231
    %v1237 = vadd.f32 %v1204, %v1231
    %v1238 = vadd.f32 %v1205, %v1231
    %v1239 = vadd.f32 %v1206, %v1231
    %v1240 = vadd.f32 %v1207, %v1231
    %v1241 = vadd.f32 %v1208, %v1231
    %v1242 = vadd.f32 %v1209, %v1231
    %v1243 = vadd.f32 %v1210, %v1231
    %v1244 = vadd.f32 %v1211, %v1231
    %v1245 = vadd.f32 %v1212, %v1231
    %v1246 = vadd.f32 %v1213, %v1231
    %v1247 = vadd.f32 %v1214, %v1231
    %v1248 = vadd.f32 %v1215, %v1231
    %v1249 = vadd.f32 %v1216, %v1231
    %v1250 = vadd.f32 %v1217, %v1231
    %v1251 = vadd.f32 %v1218, %v1231
    %v1252 = vadd.f32 %v1219, %v1231
    %v1253 = vadd.f32 %v1220, %v1231
    %v1254 = vadd.f32 %v1221, %v1231
    %v1255 = vadd.f32 %v1222, %v1231
    %v1256 = vadd.f32 %v1223, %v1231
    %v1257 = vadd.f32 %v1224, %v1231
    %v1258 = vadd.f32 %v1225, %v1231
    %v1259 = vadd.f32 %v1226, %v1231
    %v1260 = vadd.f32 %v1227, %v1231
    %v1261 = vadd.f32 %v1228, %v1231
    %v1262 = vadd.f32 %v1229, %v1231
    %v1263 = vadd.f32 %v1230, %v1231
    %v1264 = vpack.c.bf16 %v1233, %v1232
    %v1265 = vpack.c.bf16 %v1235, %v1234
    %v1266 = vpack.c.bf16 %v1237, %v1236
    %v1267 = vpack.c.bf16 %v1239, %v1238
    %v1268 = vpack.c.bf16 %v1241, %v1240
    %v1269 = vpack.c.bf16 %v1243, %v1242
    %v1270 = vpack.c.bf16 %v1245, %v1244
    %v1271 = vpack.c.bf16 %v1247, %v1246
    %v1272 = vpack.c.bf16 %v1249, %v1248
    %v1273 = vpack.c.bf16 %v1251, %v1250
    %v1274 = vpack.c.bf16 %v1253, %v1252
    %v1275 = vpack.c.bf16 %v1255, %v1254
    %v1276 = vpack.c.bf16 %v1257, %v1256
    %v1277 = vpack.c.bf16 %v1259, %v1258
    %v1278 = vpack.c.bf16 %v1261, %v1260
    %v1279 = vpack.c.bf16 %v1263, %v1262
    %1280 = vmatpush.bf16.msra.mxu0 %v1271
    %1281 = vmatpush.bf16.msra.mxu0 %v1270
    %1282 = vmatpush.bf16.msra.mxu0 %v1269
    %1283 = vmatpush.bf16.msra.mxu0 %v1268
    %1284 = vmatpush.bf16.msra.mxu0 %v1267
    %1285 = vmatpush.bf16.msra.mxu0 %v1266
    %1286 = vmatpush.bf16.msra.mxu0 %v1265
    %1287 = vmatpush.bf16.msra.mxu0 %v1264
    %1288 = vmatmul.bf16.gmra.mxu0 %v689
    %v1289 = vpop.f32.mrf.mxu0
    %v1290 = vadd.f32 0.0, %v1289
    %v1291 = vpop.f32.mrf.mxu0
    %v1292 = vadd.f32 0.0, %v1291
    %1293 = vmatmul.bf16.gmra.mxu0 %v691
    %v1294 = vpop.f32.mrf.mxu0
    %v1295 = vadd.f32 0.0, %v1294
    %v1296 = vpop.f32.mrf.mxu0
    %v1297 = vadd.f32 0.0, %v1296
    %1298 = vmatmul.bf16.gmra.mxu0 %v693
    %v1299 = vpop.f32.mrf.mxu0
    %v1300 = vadd.f32 0.0, %v1299
    %v1301 = vpop.f32.mrf.mxu0
    %v1302 = vadd.f32 0.0, %v1301
    %1303 = vmatmul.bf16.gmra.mxu0 %v695
    %v1304 = vpop.f32.mrf.mxu0
    %v1305 = vadd.f32 0.0, %v1304
    %v1306 = vpop.f32.mrf.mxu0
    %v1307 = vadd.f32 0.0, %v1306
    %1308 = vmatmul.bf16.gmra.mxu0 %v697
    %v1309 = vpop.f32.mrf.mxu0
    %v1310 = vadd.f32 0.0, %v1309
    %v1311 = vpop.f32.mrf.mxu0
    %v1312 = vadd.f32 0.0, %v1311
    %1313 = vmatmul.bf16.gmra.mxu0 %v699
    %v1314 = vpop.f32.mrf.mxu0
    %v1315 = vadd.f32 0.0, %v1314
    %v1316 = vpop.f32.mrf.mxu0
    %v1317 = vadd.f32 0.0, %v1316
    %1318 = vmatmul.bf16.gmra.mxu0 %v701
    %v1319 = vpop.f32.mrf.mxu0
    %v1320 = vadd.f32 0.0, %v1319
    %v1321 = vpop.f32.mrf.mxu0
    %v1322 = vadd.f32 0.0, %v1321
    %1323 = vmatmul.bf16.gmra.mxu0 %v703
    %v1324 = vpop.f32.mrf.mxu0
    %v1325 = vadd.f32 0.0, %v1324
    %v1326 = vpop.f32.mrf.mxu0
    %v1327 = vadd.f32 0.0, %v1326
    %1328 = vmatmul.bf16.gmra.mxu0 %v705
    %v1329 = vpop.f32.mrf.mxu0
    %v1330 = vadd.f32 0.0, %v1329
    %v1331 = vpop.f32.mrf.mxu0
    %v1332 = vadd.f32 0.0, %v1331
    %1333 = vmatmul.bf16.gmra.mxu0 %v707
    %v1334 = vpop.f32.mrf.mxu0
    %v1335 = vadd.f32 0.0, %v1334
    %v1336 = vpop.f32.mrf.mxu0
    %v1337 = vadd.f32 0.0, %v1336
    %1338 = vmatmul.bf16.gmra.mxu0 %v709
    %v1339 = vpop.f32.mrf.mxu0
    %v1340 = vadd.f32 0.0, %v1339
    %v1341 = vpop.f32.mrf.mxu0
    %v1342 = vadd.f32 0.0, %v1341
    %1343 = vmatmul.bf16.gmra.mxu0 %v711
    %v1344 = vpop.f32.mrf.mxu0
    %v1345 = vadd.f32 0.0, %v1344
    %v1346 = vpop.f32.mrf.mxu0
    %v1347 = vadd.f32 0.0, %v1346
    %1348 = vmatmul.bf16.gmra.mxu0 %v713
    %v1349 = vpop.f32.mrf.mxu0
    %v1350 = vadd.f32 0.0, %v1349
    %v1351 = vpop.f32.mrf.mxu0
    %v1352 = vadd.f32 0.0, %v1351
    %1353 = vmatmul.bf16.gmra.mxu0 %v715
    %v1354 = vpop.f32.mrf.mxu0
    %v1355 = vadd.f32 0.0, %v1354
    %v1356 = vpop.f32.mrf.mxu0
    %v1357 = vadd.f32 0.0, %v1356
    %1358 = vmatmul.bf16.gmra.mxu0 %v717
    %v1359 = vpop.f32.mrf.mxu0
    %v1360 = vadd.f32 0.0, %v1359
    %v1361 = vpop.f32.mrf.mxu0
    %v1362 = vadd.f32 0.0, %v1361
    %1363 = vmatmul.bf16.gmra.mxu0 %v719
    %v1364 = vpop.f32.mrf.mxu0
    %v1365 = vadd.f32 0.0, %v1364
    %v1366 = vpop.f32.mrf.mxu0
    %v1367 = vadd.f32 0.0, %v1366
    %1368 = vdwg.mxu0
    %1369 = vmatpush.bf16.msra.mxu0 %v1279
    %1370 = vmatpush.bf16.msra.mxu0 %v1278
    %1371 = vmatpush.bf16.msra.mxu0 %v1277
    %1372 = vmatpush.bf16.msra.mxu0 %v1276
    %1373 = vmatpush.bf16.msra.mxu0 %v1275
    %1374 = vmatpush.bf16.msra.mxu0 %v1274
    %1375 = vmatpush.bf16.msra.mxu0 %v1273
    %1376 = vmatpush.bf16.msra.mxu0 %v1272
    %1377 = vmatmul.bf16.gmra.mxu0 %v690
    %v1378 = vpop.f32.mrf.mxu0
    %v1379 = vadd.f32 %v1290, %v1378
    %v1380 = vpop.f32.mrf.mxu0
    %v1381 = vadd.f32 %v1292, %v1380
    %1382 = vmatmul.bf16.gmra.mxu0 %v692
    %v1383 = vpop.f32.mrf.mxu0
    %v1384 = vadd.f32 %v1295, %v1383
    %v1385 = vpop.f32.mrf.mxu0
    %v1386 = vadd.f32 %v1297, %v1385
    %1387 = vmatmul.bf16.gmra.mxu0 %v694
    %v1388 = vpop.f32.mrf.mxu0
    %v1389 = vadd.f32 %v1300, %v1388
    %v1390 = vpop.f32.mrf.mxu0
    %v1391 = vadd.f32 %v1302, %v1390
    %1392 = vmatmul.bf16.gmra.mxu0 %v696
    %v1393 = vpop.f32.mrf.mxu0
    %v1394 = vadd.f32 %v1305, %v1393
    %v1395 = vpop.f32.mrf.mxu0
    %v1396 = vadd.f32 %v1307, %v1395
    %1397 = vmatmul.bf16.gmra.mxu0 %v698
    %v1398 = vpop.f32.mrf.mxu0
    %v1399 = vadd.f32 %v1310, %v1398
    %v1400 = vpop.f32.mrf.mxu0
    %v1401 = vadd.f32 %v1312, %v1400
    %1402 = vmatmul.bf16.gmra.mxu0 %v700
    %v1403 = vpop.f32.mrf.mxu0
    %v1404 = vadd.f32 %v1315, %v1403
    %v1405 = vpop.f32.mrf.mxu0
    %v1406 = vadd.f32 %v1317, %v1405
    %1407 = vmatmul.bf16.gmra.mxu0 %v702
    %v1408 = vpop.f32.mrf.mxu0
    %v1409 = vadd.f32 %v1320, %v1408
    %v1410 = vpop.f32.mrf.mxu0
    %v1411 = vadd.f32 %v1322, %v1410
    %1412 = vmatmul.bf16.gmra.mxu0 %v704
    %v1413 = vpop.f32.mrf.mxu0
    %v1414 = vadd.f32 %v1325, %v1413
    %v1415 = vpop.f32.mrf.mxu0
    %v1416 = vadd.f32 %v1327, %v1415
    %1417 = vmatmul.bf16.gmra.mxu0 %v706
    %v1418 = vpop.f32.mrf.mxu0
    %v1419 = vadd.f32 %v1330, %v1418
    %v1420 = vpop.f32.mrf.mxu0
    %v1421 = vadd.f32 %v1332, %v1420
    %1422 = vmatmul.bf16.gmra.mxu0 %v708
    %v1423 = vpop.f32.mrf.mxu0
    %v1424 = vadd.f32 %v1335, %v1423
    %v1425 = vpop.f32.mrf.mxu0
    %v1426 = vadd.f32 %v1337, %v1425
    %1427 = vmatmul.bf16.gmra.mxu0 %v710
    %v1428 = vpop.f32.mrf.mxu0
    %v1429 = vadd.f32 %v1340, %v1428
    %v1430 = vpop.f32.mrf.mxu0
    %v1431 = vadd.f32 %v1342, %v1430
    %1432 = vmatmul.bf16.gmra.mxu0 %v712
    %v1433 = vpop.f32.mrf.mxu0
    %v1434 = vadd.f32 %v1345, %v1433
    %v1435 = vpop.f32.mrf.mxu0
    %v1436 = vadd.f32 %v1347, %v1435
    %1437 = vmatmul.bf16.gmra.mxu0 %v714
    %v1438 = vpop.f32.mrf.mxu0
    %v1439 = vadd.f32 %v1350, %v1438
    %v1440 = vpop.f32.mrf.mxu0
    %v1441 = vadd.f32 %v1352, %v1440
    %1442 = vmatmul.bf16.gmra.mxu0 %v716
    %v1443 = vpop.f32.mrf.mxu0
    %v1444 = vadd.f32 %v1355, %v1443
    %v1445 = vpop.f32.mrf.mxu0
    %v1446 = vadd.f32 %v1357, %v1445
    %1447 = vmatmul.bf16.gmra.mxu0 %v718
    %v1448 = vpop.f32.mrf.mxu0
    %v1449 = vadd.f32 %v1360, %v1448
    %v1450 = vpop.f32.mrf.mxu0
    %v1451 = vadd.f32 %v1362, %v1450
    %1452 = vmatmul.bf16.gmra.mxu0 %v720
    %v1453 = vpop.f32.mrf.mxu0
    %v1454 = vadd.f32 %v1365, %v1453
    %v1455 = vpop.f32.mrf.mxu0
    %v1456 = vadd.f32 %v1367, %v1455
    %1457 = vdwg.mxu0
    %v1458 = vpack.c.bf16 %v1381, %v1379
    %v1459 = vpack.c.bf16 %v1386, %v1384
    %v1460 = vpack.c.bf16 %v1391, %v1389
    %v1461 = vpack.c.bf16 %v1396, %v1394
    %v1462 = vpack.c.bf16 %v1401, %v1399
    %v1463 = vpack.c.bf16 %v1406, %v1404
    %v1464 = vpack.c.bf16 %v1411, %v1409
    %v1465 = vpack.c.bf16 %v1416, %v1414
    %v1466 = vpack.c.bf16 %v1421, %v1419
    %v1467 = vpack.c.bf16 %v1426, %v1424
    %v1468 = vpack.c.bf16 %v1431, %v1429
    %v1469 = vpack.c.bf16 %v1436, %v1434
    %v1470 = vpack.c.bf16 %v1441, %v1439
    %v1471 = vpack.c.bf16 %v1446, %v1444
    %v1472 = vpack.c.bf16 %v1451, %v1449
    %v1473 = vpack.c.bf16 %v1456, %v1454
    %s1474 = scalar_lea.vmem [#allocation8], 128
    %v1475 = vld [vmem:[%s1474] sm:$0xf]
    %v1476 = vld [vmem:[%s1474 + $0x4] sm:$0xf]
    %v1477 = vld [vmem:[%s1474 + $0x8] sm:$0xf]
    %v1478 = vld [vmem:[%s1474 + $0xc] sm:$0xf]
    %v1479 = vld [vmem:[%s1474 + $0x10] sm:$0xf]
    %v1480 = vld [vmem:[%s1474 + $0x14] sm:$0xf]
    %v1481 = vld [vmem:[%s1474 + $0x18] sm:$0xf]
    %v1482 = vld [vmem:[%s1474 + $0x1c] sm:$0xf]
    %v1483 = vld [vmem:[%s1474 + $0x20] sm:$0xf]
    %v1484 = vld [vmem:[%s1474 + $0x24] sm:$0xf]
    %v1485 = vld [vmem:[%s1474 + $0x28] sm:$0xf]
    %v1486 = vld [vmem:[%s1474 + $0x2c] sm:$0xf]
    %v1487 = vld [vmem:[%s1474 + $0x30] sm:$0xf]
    %v1488 = vld [vmem:[%s1474 + $0x34] sm:$0xf]
    %v1489 = vld [vmem:[%s1474 + $0x38] sm:$0xf]
    %v1490 = vld [vmem:[%s1474 + $0x3c] sm:$0xf]
    %v1491 = vperm.slane %v100, 3
    %v1508 = vunpack.c.l.b16 %v1475
    %v1509 = vunpack.c.l.b16 %v1476
    %v1510 = vunpack.c.l.b16 %v1477
    %v1511 = vunpack.c.l.b16 %v1478
    %v1512 = vunpack.c.l.b16 %v1479
    %v1513 = vunpack.c.l.b16 %v1480
    %v1514 = vunpack.c.l.b16 %v1481
    %v1515 = vunpack.c.l.b16 %v1482
    %v1516 = vunpack.c.l.b16 %v1483
    %v1517 = vunpack.c.l.b16 %v1484
    %v1518 = vunpack.c.l.b16 %v1485
    %v1519 = vunpack.c.l.b16 %v1486
    %v1520 = vunpack.c.l.b16 %v1487
    %v1521 = vunpack.c.l.b16 %v1488
    %v1522 = vunpack.c.l.b16 %v1489
    %v1523 = vunpack.c.l.b16 %v1490
    %v1524 = vpack.c.b16 %v1509, %v1508
    %v1525 = vpack.c.b16 %v1511, %v1510
    %v1526 = vpack.c.b16 %v1513, %v1512
    %v1527 = vpack.c.b16 %v1515, %v1514
    %v1528 = vpack.c.b16 %v1517, %v1516
    %v1529 = vpack.c.b16 %v1519, %v1518
    %v1530 = vpack.c.b16 %v1521, %v1520
    %v1531 = vpack.c.b16 %v1523, %v1522
    %1540 = vmatpush.bf16.msra.mxu0 %v1531
    %1541 = vmatpush.bf16.msra.mxu0 %v1530
    %1542 = vmatpush.bf16.msra.mxu0 %v1529
    %1543 = vmatpush.bf16.msra.mxu0 %v1528
    %1544 = vmatpush.bf16.msra.mxu0 %v1527
    %1545 = vmatpush.bf16.msra.mxu0 %v1526
    %1546 = vmatpush.bf16.msra.mxu0 %v1525
    %1547 = vmatpush.bf16.msra.mxu0 %v1524
    %1548 = vmatmul.bf16.gmra.mxu0 %v1458
    %v1549 = vpop.f32.mrf.mxu0
    %v1550 = vadd.f32 %v1491, %v1549
    %v1551 = vpop.f32.mrf.mxu0
    %v1552 = vadd.f32 %v1491, %v1551
    %1553 = vmatmul.bf16.gmra.mxu0 %v1459
    %v1554 = vpop.f32.mrf.mxu0
    %v1555 = vadd.f32 %v1491, %v1554
    %v1556 = vpop.f32.mrf.mxu0
    %v1557 = vadd.f32 %v1491, %v1556
    %1558 = vmatmul.bf16.gmra.mxu0 %v1460
    %v1559 = vpop.f32.mrf.mxu0
    %v1560 = vadd.f32 %v1491, %v1559
    %v1561 = vpop.f32.mrf.mxu0
    %v1562 = vadd.f32 %v1491, %v1561
    %1563 = vmatmul.bf16.gmra.mxu0 %v1461
    %v1564 = vpop.f32.mrf.mxu0
    %v1565 = vadd.f32 %v1491, %v1564
    %v1566 = vpop.f32.mrf.mxu0
    %v1567 = vadd.f32 %v1491, %v1566
    %1568 = vmatmul.bf16.gmra.mxu0 %v1462
    %v1569 = vpop.f32.mrf.mxu0
    %v1570 = vadd.f32 %v1491, %v1569
    %v1571 = vpop.f32.mrf.mxu0
    %v1572 = vadd.f32 %v1491, %v1571
    %1573 = vmatmul.bf16.gmra.mxu0 %v1463
    %v1574 = vpop.f32.mrf.mxu0
    %v1575 = vadd.f32 %v1491, %v1574
    %v1576 = vpop.f32.mrf.mxu0
    %v1577 = vadd.f32 %v1491, %v1576
    %1578 = vmatmul.bf16.gmra.mxu0 %v1464
    %v1579 = vpop.f32.mrf.mxu0
    %v1580 = vadd.f32 %v1491, %v1579
    %v1581 = vpop.f32.mrf.mxu0
    %v1582 = vadd.f32 %v1491, %v1581
    %1583 = vmatmul.bf16.gmra.mxu0 %v1465
    %v1584 = vpop.f32.mrf.mxu0
    %v1585 = vadd.f32 %v1491, %v1584
    %v1586 = vpop.f32.mrf.mxu0
    %v1587 = vadd.f32 %v1491, %v1586
    %1588 = vmatmul.bf16.gmra.mxu0 %v1466
    %v1589 = vpop.f32.mrf.mxu0
    %v1590 = vadd.f32 %v1491, %v1589
    %v1591 = vpop.f32.mrf.mxu0
    %v1592 = vadd.f32 %v1491, %v1591
    %1593 = vmatmul.bf16.gmra.mxu0 %v1467
    %v1594 = vpop.f32.mrf.mxu0
    %v1595 = vadd.f32 %v1491, %v1594
    %v1596 = vpop.f32.mrf.mxu0
    %v1597 = vadd.f32 %v1491, %v1596
    %1598 = vmatmul.bf16.gmra.mxu0 %v1468
    %v1599 = vpop.f32.mrf.mxu0
    %v1600 = vadd.f32 %v1491, %v1599
    %v1601 = vpop.f32.mrf.mxu0
    %v1602 = vadd.f32 %v1491, %v1601
    %1603 = vmatmul.bf16.gmra.mxu0 %v1469
    %v1604 = vpop.f32.mrf.mxu0
    %v1605 = vadd.f32 %v1491, %v1604
    %v1606 = vpop.f32.mrf.mxu0
    %v1607 = vadd.f32 %v1491, %v1606
    %1608 = vmatmul.bf16.gmra.mxu0 %v1470
    %v1609 = vpop.f32.mrf.mxu0
    %v1610 = vadd.f32 %v1491, %v1609
    %v1611 = vpop.f32.mrf.mxu0
    %v1612 = vadd.f32 %v1491, %v1611
    %1613 = vmatmul.bf16.gmra.mxu0 %v1471
    %v1614 = vpop.f32.mrf.mxu0
    %v1615 = vadd.f32 %v1491, %v1614
    %v1616 = vpop.f32.mrf.mxu0
    %v1617 = vadd.f32 %v1491, %v1616
    %1618 = vmatmul.bf16.gmra.mxu0 %v1472
    %v1619 = vpop.f32.mrf.mxu0
    %v1620 = vadd.f32 %v1491, %v1619
    %v1621 = vpop.f32.mrf.mxu0
    %v1622 = vadd.f32 %v1491, %v1621
    %1623 = vmatmul.bf16.gmra.mxu0 %v1473
    %v1624 = vpop.f32.mrf.mxu0
    %v1625 = vadd.f32 %v1491, %v1624
    %v1626 = vpop.f32.mrf.mxu0
    %v1627 = vadd.f32 %v1491, %v1626
    %1628 = vdwg.mxu0
    %v1629 = vmax.f32 %v1550, 0.0
    %v1630 = vmax.f32 %v1552, 0.0
    %v1631 = vmax.f32 %v1555, 0.0
    %v1632 = vmax.f32 %v1557, 0.0
    %v1633 = vmax.f32 %v1560, 0.0
    %v1634 = vmax.f32 %v1562, 0.0
    %v1635 = vmax.f32 %v1565, 0.0
    %v1636 = vmax.f32 %v1567, 0.0
    %v1637 = vmax.f32 %v1570, 0.0
    %v1638 = vmax.f32 %v1572, 0.0
    %v1639 = vmax.f32 %v1575, 0.0
    %v1640 = vmax.f32 %v1577, 0.0
    %v1641 = vmax.f32 %v1580, 0.0
    %v1642 = vmax.f32 %v1582, 0.0
    %v1643 = vmax.f32 %v1585, 0.0
    %v1644 = vmax.f32 %v1587, 0.0
    %v1645 = vmax.f32 %v1590, 0.0
    %v1646 = vmax.f32 %v1592, 0.0
    %v1647 = vmax.f32 %v1595, 0.0
    %v1648 = vmax.f32 %v1597, 0.0
    %v1649 = vmax.f32 %v1600, 0.0
    %v1650 = vmax.f32 %v1602, 0.0
    %v1651 = vmax.f32 %v1605, 0.0
    %v1652 = vmax.f32 %v1607, 0.0
    %v1653 = vmax.f32 %v1610, 0.0
    %v1654 = vmax.f32 %v1612, 0.0
    %v1655 = vmax.f32 %v1615, 0.0
    %v1656 = vmax.f32 %v1617, 0.0
    %v1657 = vmax.f32 %v1620, 0.0
    %v1658 = vmax.f32 %v1622, 0.0
    %v1659 = vmax.f32 %v1625, 0.0
    %v1660 = vmax.f32 %v1627, 0.0
    %v1661 = vpack.c.bf16 %v1629, %v1629
    %v1662 = vpack.c.bf16 %v1630, %v1630
    %v1663 = vpack.c.bf16 %v1631, %v1631
    %v1664 = vpack.c.bf16 %v1632, %v1632
    %v1665 = vpack.c.bf16 %v1633, %v1633
    %v1666 = vpack.c.bf16 %v1634, %v1634
    %v1667 = vpack.c.bf16 %v1635, %v1635
    %v1668 = vpack.c.bf16 %v1636, %v1636
    %v1669 = vpack.c.bf16 %v1637, %v1637
    %v1670 = vpack.c.bf16 %v1638, %v1638
    %v1671 = vpack.c.bf16 %v1639, %v1639
    %v1672 = vpack.c.bf16 %v1640, %v1640
    %v1673 = vpack.c.bf16 %v1641, %v1641
    %v1674 = vpack.c.bf16 %v1642, %v1642
    %v1675 = vpack.c.bf16 %v1643, %v1643
    %v1676 = vpack.c.bf16 %v1644, %v1644
    %v1677 = vpack.c.bf16 %v1645, %v1645
    %v1678 = vpack.c.bf16 %v1646, %v1646
    %v1679 = vpack.c.bf16 %v1647, %v1647
    %v1680 = vpack.c.bf16 %v1648, %v1648
    %v1681 = vpack.c.bf16 %v1649, %v1649
    %v1682 = vpack.c.bf16 %v1650, %v1650
    %v1683 = vpack.c.bf16 %v1651, %v1651
    %v1684 = vpack.c.bf16 %v1652, %v1652
    %v1685 = vpack.c.bf16 %v1653, %v1653
    %v1686 = vpack.c.bf16 %v1654, %v1654
    %v1687 = vpack.c.bf16 %v1655, %v1655
    %v1688 = vpack.c.bf16 %v1656, %v1656
    %v1689 = vpack.c.bf16 %v1657, %v1657
    %v1690 = vpack.c.bf16 %v1658, %v1658
    %v1691 = vpack.c.bf16 %v1659, %v1659
    %v1692 = vpack.c.bf16 %v1660, %v1660
    %v1693 = vunpack.c.l.bf16 %v1661
    %v1694 = vunpack.c.l.bf16 %v1662
    %v1695 = vunpack.c.l.bf16 %v1663
    %v1696 = vunpack.c.l.bf16 %v1664
    %v1697 = vunpack.c.l.bf16 %v1665
    %v1698 = vunpack.c.l.bf16 %v1666
    %v1699 = vunpack.c.l.bf16 %v1667
    %v1700 = vunpack.c.l.bf16 %v1668
    %v1701 = vunpack.c.l.bf16 %v1669
    %v1702 = vunpack.c.l.bf16 %v1670
    %v1703 = vunpack.c.l.bf16 %v1671
    %v1704 = vunpack.c.l.bf16 %v1672
    %v1705 = vunpack.c.l.bf16 %v1673
    %v1706 = vunpack.c.l.bf16 %v1674
    %v1707 = vunpack.c.l.bf16 %v1675
    %v1708 = vunpack.c.l.bf16 %v1676
    %v1709 = vunpack.c.l.bf16 %v1677
    %v1710 = vunpack.c.l.bf16 %v1678
    %v1711 = vunpack.c.l.bf16 %v1679
    %v1712 = vunpack.c.l.bf16 %v1680
    %v1713 = vunpack.c.l.bf16 %v1681
    %v1714 = vunpack.c.l.bf16 %v1682
    %v1715 = vunpack.c.l.bf16 %v1683
    %v1716 = vunpack.c.l.bf16 %v1684
    %v1717 = vunpack.c.l.bf16 %v1685
    %v1718 = vunpack.c.l.bf16 %v1686
    %v1719 = vunpack.c.l.bf16 %v1687
    %v1720 = vunpack.c.l.bf16 %v1688
    %v1721 = vunpack.c.l.bf16 %v1689
    %v1722 = vunpack.c.l.bf16 %v1690
    %v1723 = vunpack.c.l.bf16 %v1691
    %v1724 = vunpack.c.l.bf16 %v1692
    %v1725 = vperm.slane %v99, 6
    %v1726 = vmul.f32 %v1693, %v1725
    %v1727 = vmul.f32 %v1694, %v1725
    %v1728 = vmul.f32 %v1695, %v1725
    %v1729 = vmul.f32 %v1696, %v1725
    %v1730 = vmul.f32 %v1697, %v1725
    %v1731 = vmul.f32 %v1698, %v1725
    %v1732 = vmul.f32 %v1699, %v1725
    %v1733 = vmul.f32 %v1700, %v1725
    %v1734 = vmul.f32 %v1701, %v1725
    %v1735 = vmul.f32 %v1702, %v1725
    %v1736 = vmul.f32 %v1703, %v1725
    %v1737 = vmul.f32 %v1704, %v1725
    %v1738 = vmul.f32 %v1705, %v1725
    %v1739 = vmul.f32 %v1706, %v1725
    %v1740 = vmul.f32 %v1707, %v1725
    %v1741 = vmul.f32 %v1708, %v1725
    %v1742 = vmul.f32 %v1709, %v1725
    %v1743 = vmul.f32 %v1710, %v1725
    %v1744 = vmul.f32 %v1711, %v1725
    %v1745 = vmul.f32 %v1712, %v1725
    %v1746 = vmul.f32 %v1713, %v1725
    %v1747 = vmul.f32 %v1714, %v1725
    %v1748 = vmul.f32 %v1715, %v1725
    %v1749 = vmul.f32 %v1716, %v1725
    %v1750 = vmul.f32 %v1717, %v1725
    %v1751 = vmul.f32 %v1718, %v1725
    %v1752 = vmul.f32 %v1719, %v1725
    %v1753 = vmul.f32 %v1720, %v1725
    %v1754 = vmul.f32 %v1721, %v1725
    %v1755 = vmul.f32 %v1722, %v1725
    %v1756 = vmul.f32 %v1723, %v1725
    %v1757 = vmul.f32 %v1724, %v1725
    %v1758 = vperm.slane %v100, 1
    %v1759 = vadd.f32 %v1726, %v1758
    %v1760 = vadd.f32 %v1727, %v1758
    %v1761 = vadd.f32 %v1728, %v1758
    %v1762 = vadd.f32 %v1729, %v1758
    %v1763 = vadd.f32 %v1730, %v1758
    %v1764 = vadd.f32 %v1731, %v1758
    %v1765 = vadd.f32 %v1732, %v1758
    %v1766 = vadd.f32 %v1733, %v1758
    %v1767 = vadd.f32 %v1734, %v1758
    %v1768 = vadd.f32 %v1735, %v1758
    %v1769 = vadd.f32 %v1736, %v1758
    %v1770 = vadd.f32 %v1737, %v1758
    %v1771 = vadd.f32 %v1738, %v1758
    %v1772 = vadd.f32 %v1739, %v1758
    %v1773 = vadd.f32 %v1740, %v1758
    %v1774 = vadd.f32 %v1741, %v1758
    %v1775 = vadd.f32 %v1742, %v1758
    %v1776 = vadd.f32 %v1743, %v1758
    %v1777 = vadd.f32 %v1744, %v1758
    %v1778 = vadd.f32 %v1745, %v1758
    %v1779 = vadd.f32 %v1746, %v1758
    %v1780 = vadd.f32 %v1747, %v1758
    %v1781 = vadd.f32 %v1748, %v1758
    %v1782 = vadd.f32 %v1749, %v1758
    %v1783 = vadd.f32 %v1750, %v1758
    %v1784 = vadd.f32 %v1751, %v1758
    %v1785 = vadd.f32 %v1752, %v1758
    %v1786 = vadd.f32 %v1753, %v1758
    %v1787 = vadd.f32 %v1754, %v1758
    %v1788 = vadd.f32 %v1755, %v1758
    %v1789 = vadd.f32 %v1756, %v1758
    %v1790 = vadd.f32 %v1757, %v1758
    %v1791 = vpack.c.bf16 %v1760, %v1759
    %v1792 = vpack.c.bf16 %v1762, %v1761
    %v1793 = vpack.c.bf16 %v1764, %v1763
    %v1794 = vpack.c.bf16 %v1766, %v1765
    %v1795 = vpack.c.bf16 %v1768, %v1767
    %v1796 = vpack.c.bf16 %v1770, %v1769
    %v1797 = vpack.c.bf16 %v1772, %v1771
    %v1798 = vpack.c.bf16 %v1774, %v1773
    %v1799 = vpack.c.bf16 %v1776, %v1775
    %v1800 = vpack.c.bf16 %v1778, %v1777
    %v1801 = vpack.c.bf16 %v1780, %v1779
    %v1802 = vpack.c.bf16 %v1782, %v1781
    %v1803 = vpack.c.bf16 %v1784, %v1783
    %v1804 = vpack.c.bf16 %v1786, %v1785
    %v1805 = vpack.c.bf16 %v1788, %v1787
    %v1806 = vpack.c.bf16 %v1790, %v1789
    %1807 = vmatpush.bf16.msra.mxu0 %v1798
    %1808 = vmatpush.bf16.msra.mxu0 %v1797
    %1809 = vmatpush.bf16.msra.mxu0 %v1796
    %1810 = vmatpush.bf16.msra.mxu0 %v1795
    %1811 = vmatpush.bf16.msra.mxu0 %v1794
    %1812 = vmatpush.bf16.msra.mxu0 %v1793
    %1813 = vmatpush.bf16.msra.mxu0 %v1792
    %1814 = vmatpush.bf16.msra.mxu0 %v1791
    %1815 = vmatmul.bf16.gmra.mxu0 %v689
    %v1816 = vpop.f32.mrf.mxu0
    %v1817 = vadd.f32 0.0, %v1816
    %v1818 = vpop.f32.mrf.mxu0
    %v1819 = vadd.f32 0.0, %v1818
    %1820 = vmatmul.bf16.gmra.mxu0 %v691
    %v1821 = vpop.f32.mrf.mxu0
    %v1822 = vadd.f32 0.0, %v1821
    %v1823 = vpop.f32.mrf.mxu0
    %v1824 = vadd.f32 0.0, %v1823
    %1825 = vmatmul.bf16.gmra.mxu0 %v693
    %v1826 = vpop.f32.mrf.mxu0
    %v1827 = vadd.f32 0.0, %v1826
    %v1828 = vpop.f32.mrf.mxu0
    %v1829 = vadd.f32 0.0, %v1828
    %1830 = vmatmul.bf16.gmra.mxu0 %v695
    %v1831 = vpop.f32.mrf.mxu0
    %v1832 = vadd.f32 0.0, %v1831
    %v1833 = vpop.f32.mrf.mxu0
    %v1834 = vadd.f32 0.0, %v1833
    %1835 = vmatmul.bf16.gmra.mxu0 %v697
    %v1836 = vpop.f32.mrf.mxu0
    %v1837 = vadd.f32 0.0, %v1836
    %v1838 = vpop.f32.mrf.mxu0
    %v1839 = vadd.f32 0.0, %v1838
    %1840 = vmatmul.bf16.gmra.mxu0 %v699
    %v1841 = vpop.f32.mrf.mxu0
    %v1842 = vadd.f32 0.0, %v1841
    %v1843 = vpop.f32.mrf.mxu0
    %v1844 = vadd.f32 0.0, %v1843
    %1845 = vmatmul.bf16.gmra.mxu0 %v701
    %v1846 = vpop.f32.mrf.mxu0
    %v1847 = vadd.f32 0.0, %v1846
    %v1848 = vpop.f32.mrf.mxu0
    %v1849 = vadd.f32 0.0, %v1848
    %1850 = vmatmul.bf16.gmra.mxu0 %v703
    %v1851 = vpop.f32.mrf.mxu0
    %v1852 = vadd.f32 0.0, %v1851
    %v1853 = vpop.f32.mrf.mxu0
    %v1854 = vadd.f32 0.0, %v1853
    %1855 = vmatmul.bf16.gmra.mxu0 %v705
    %v1856 = vpop.f32.mrf.mxu0
    %v1857 = vadd.f32 0.0, %v1856
    %v1858 = vpop.f32.mrf.mxu0
    %v1859 = vadd.f32 0.0, %v1858
    %1860 = vmatmul.bf16.gmra.mxu0 %v707
    %v1861 = vpop.f32.mrf.mxu0
    %v1862 = vadd.f32 0.0, %v1861
    %v1863 = vpop.f32.mrf.mxu0
    %v1864 = vadd.f32 0.0, %v1863
    %1865 = vmatmul.bf16.gmra.mxu0 %v709
    %v1866 = vpop.f32.mrf.mxu0
    %v1867 = vadd.f32 0.0, %v1866
    %v1868 = vpop.f32.mrf.mxu0
    %v1869 = vadd.f32 0.0, %v1868
    %1870 = vmatmul.bf16.gmra.mxu0 %v711
    %v1871 = vpop.f32.mrf.mxu0
    %v1872 = vadd.f32 0.0, %v1871
    %v1873 = vpop.f32.mrf.mxu0
    %v1874 = vadd.f32 0.0, %v1873
    %1875 = vmatmul.bf16.gmra.mxu0 %v713
    %v1876 = vpop.f32.mrf.mxu0
    %v1877 = vadd.f32 0.0, %v1876
    %v1878 = vpop.f32.mrf.mxu0
    %v1879 = vadd.f32 0.0, %v1878
    %1880 = vmatmul.bf16.gmra.mxu0 %v715
    %v1881 = vpop.f32.mrf.mxu0
    %v1882 = vadd.f32 0.0, %v1881
    %v1883 = vpop.f32.mrf.mxu0
    %v1884 = vadd.f32 0.0, %v1883
    %1885 = vmatmul.bf16.gmra.mxu0 %v717
    %v1886 = vpop.f32.mrf.mxu0
    %v1887 = vadd.f32 0.0, %v1886
    %v1888 = vpop.f32.mrf.mxu0
    %v1889 = vadd.f32 0.0, %v1888
    %1890 = vmatmul.bf16.gmra.mxu0 %v719
    %v1891 = vpop.f32.mrf.mxu0
    %v1892 = vadd.f32 0.0, %v1891
    %v1893 = vpop.f32.mrf.mxu0
    %v1894 = vadd.f32 0.0, %v1893
    %1895 = vdwg.mxu0
    %1896 = vmatpush.bf16.msra.mxu0 %v1806
    %1897 = vmatpush.bf16.msra.mxu0 %v1805
    %1898 = vmatpush.bf16.msra.mxu0 %v1804
    %1899 = vmatpush.bf16.msra.mxu0 %v1803
    %1900 = vmatpush.bf16.msra.mxu0 %v1802
    %1901 = vmatpush.bf16.msra.mxu0 %v1801
    %1902 = vmatpush.bf16.msra.mxu0 %v1800
    %1903 = vmatpush.bf16.msra.mxu0 %v1799
    %1904 = vmatmul.bf16.gmra.mxu0 %v690
    %v1905 = vpop.f32.mrf.mxu0
    %v1906 = vadd.f32 %v1817, %v1905
    %v1907 = vpop.f32.mrf.mxu0
    %v1908 = vadd.f32 %v1819, %v1907
    %1909 = vmatmul.bf16.gmra.mxu0 %v692
    %v1910 = vpop.f32.mrf.mxu0
    %v1911 = vadd.f32 %v1822, %v1910
    %v1912 = vpop.f32.mrf.mxu0
    %v1913 = vadd.f32 %v1824, %v1912
    %1914 = vmatmul.bf16.gmra.mxu0 %v694
    %v1915 = vpop.f32.mrf.mxu0
    %v1916 = vadd.f32 %v1827, %v1915
    %v1917 = vpop.f32.mrf.mxu0
    %v1918 = vadd.f32 %v1829, %v1917
    %1919 = vmatmul.bf16.gmra.mxu0 %v696
    %v1920 = vpop.f32.mrf.mxu0
    %v1921 = vadd.f32 %v1832, %v1920
    %v1922 = vpop.f32.mrf.mxu0
    %v1923 = vadd.f32 %v1834, %v1922
    %1924 = vmatmul.bf16.gmra.mxu0 %v698
    %v1925 = vpop.f32.mrf.mxu0
    %v1926 = vadd.f32 %v1837, %v1925
    %v1927 = vpop.f32.mrf.mxu0
    %v1928 = vadd.f32 %v1839, %v1927
    %1929 = vmatmul.bf16.gmra.mxu0 %v700
    %v1930 = vpop.f32.mrf.mxu0
    %v1931 = vadd.f32 %v1842, %v1930
    %v1932 = vpop.f32.mrf.mxu0
    %v1933 = vadd.f32 %v1844, %v1932
    %1934 = vmatmul.bf16.gmra.mxu0 %v702
    %v1935 = vpop.f32.mrf.mxu0
    %v1936 = vadd.f32 %v1847, %v1935
    %v1937 = vpop.f32.mrf.mxu0
    %v1938 = vadd.f32 %v1849, %v1937
    %1939 = vmatmul.bf16.gmra.mxu0 %v704
    %v1940 = vpop.f32.mrf.mxu0
    %v1941 = vadd.f32 %v1852, %v1940
    %v1942 = vpop.f32.mrf.mxu0
    %v1943 = vadd.f32 %v1854, %v1942
    %1944 = vmatmul.bf16.gmra.mxu0 %v706
    %v1945 = vpop.f32.mrf.mxu0
    %v1946 = vadd.f32 %v1857, %v1945
    %v1947 = vpop.f32.mrf.mxu0
    %v1948 = vadd.f32 %v1859, %v1947
    %1949 = vmatmul.bf16.gmra.mxu0 %v708
    %v1950 = vpop.f32.mrf.mxu0
    %v1951 = vadd.f32 %v1862, %v1950
    %v1952 = vpop.f32.mrf.mxu0
    %v1953 = vadd.f32 %v1864, %v1952
    %1954 = vmatmul.bf16.gmra.mxu0 %v710
    %v1955 = vpop.f32.mrf.mxu0
    %v1956 = vadd.f32 %v1867, %v1955
    %v1957 = vpop.f32.mrf.mxu0
    %v1958 = vadd.f32 %v1869, %v1957
    %1959 = vmatmul.bf16.gmra.mxu0 %v712
    %v1960 = vpop.f32.mrf.mxu0
    %v1961 = vadd.f32 %v1872, %v1960
    %v1962 = vpop.f32.mrf.mxu0
    %v1963 = vadd.f32 %v1874, %v1962
    %1964 = vmatmul.bf16.gmra.mxu0 %v714
    %v1965 = vpop.f32.mrf.mxu0
    %v1966 = vadd.f32 %v1877, %v1965
    %v1967 = vpop.f32.mrf.mxu0
    %v1968 = vadd.f32 %v1879, %v1967
    %1969 = vmatmul.bf16.gmra.mxu0 %v716
    %v1970 = vpop.f32.mrf.mxu0
    %v1971 = vadd.f32 %v1882, %v1970
    %v1972 = vpop.f32.mrf.mxu0
    %v1973 = vadd.f32 %v1884, %v1972
    %1974 = vmatmul.bf16.gmra.mxu0 %v718
    %v1975 = vpop.f32.mrf.mxu0
    %v1976 = vadd.f32 %v1887, %v1975
    %v1977 = vpop.f32.mrf.mxu0
    %v1978 = vadd.f32 %v1889, %v1977
    %1979 = vmatmul.bf16.gmra.mxu0 %v720
    %v1980 = vpop.f32.mrf.mxu0
    %v1981 = vadd.f32 %v1892, %v1980
    %v1982 = vpop.f32.mrf.mxu0
    %v1983 = vadd.f32 %v1894, %v1982
    %1984 = vdwg.mxu0
    %v1985 = vpack.c.bf16 %v1908, %v1906
    %v1986 = vpack.c.bf16 %v1913, %v1911
    %v1987 = vpack.c.bf16 %v1918, %v1916
    %v1988 = vpack.c.bf16 %v1923, %v1921
    %v1989 = vpack.c.bf16 %v1928, %v1926
    %v1990 = vpack.c.bf16 %v1933, %v1931
    %v1991 = vpack.c.bf16 %v1938, %v1936
    %v1992 = vpack.c.bf16 %v1943, %v1941
    %v1993 = vpack.c.bf16 %v1948, %v1946
    %v1994 = vpack.c.bf16 %v1953, %v1951
    %v1995 = vpack.c.bf16 %v1958, %v1956
    %v1996 = vpack.c.bf16 %v1963, %v1961
    %v1997 = vpack.c.bf16 %v1968, %v1966
    %v1998 = vpack.c.bf16 %v1973, %v1971
    %v1999 = vpack.c.bf16 %v1978, %v1976
    %v2000 = vpack.c.bf16 %v1983, %v1981
    %s2001 = scalar_lea.vmem [#allocation8], 192
    %v2002 = vld [vmem:[%s2001] sm:$0xf]
    %v2003 = vld [vmem:[%s2001 + $0x4] sm:$0xf]
    %v2004 = vld [vmem:[%s2001 + $0x8] sm:$0xf]
    %v2005 = vld [vmem:[%s2001 + $0xc] sm:$0xf]
    %v2006 = vld [vmem:[%s2001 + $0x10] sm:$0xf]
    %v2007 = vld [vmem:[%s2001 + $0x14] sm:$0xf]
    %v2008 = vld [vmem:[%s2001 + $0x18] sm:$0xf]
    %v2009 = vld [vmem:[%s2001 + $0x1c] sm:$0xf]
    %v2010 = vld [vmem:[%s2001 + $0x20] sm:$0xf]
    %v2011 = vld [vmem:[%s2001 + $0x24] sm:$0xf]
    %v2012 = vld [vmem:[%s2001 + $0x28] sm:$0xf]
    %v2013 = vld [vmem:[%s2001 + $0x2c] sm:$0xf]
    %v2014 = vld [vmem:[%s2001 + $0x30] sm:$0xf]
    %v2015 = vld [vmem:[%s2001 + $0x34] sm:$0xf]
    %v2016 = vld [vmem:[%s2001 + $0x38] sm:$0xf]
    %v2017 = vld [vmem:[%s2001 + $0x3c] sm:$0xf]
    %v2018 = vperm.slane %v100, 4
    %v2035 = vunpack.c.l.b16 %v2002
    %v2036 = vunpack.c.l.b16 %v2003
    %v2037 = vunpack.c.l.b16 %v2004
    %v2038 = vunpack.c.l.b16 %v2005
    %v2039 = vunpack.c.l.b16 %v2006
    %v2040 = vunpack.c.l.b16 %v2007
    %v2041 = vunpack.c.l.b16 %v2008
    %v2042 = vunpack.c.l.b16 %v2009
    %v2043 = vunpack.c.l.b16 %v2010
    %v2044 = vunpack.c.l.b16 %v2011
    %v2045 = vunpack.c.l.b16 %v2012
    %v2046 = vunpack.c.l.b16 %v2013
    %v2047 = vunpack.c.l.b16 %v2014
    %v2048 = vunpack.c.l.b16 %v2015
    %v2049 = vunpack.c.l.b16 %v2016
    %v2050 = vunpack.c.l.b16 %v2017
    %v2051 = vpack.c.b16 %v2036, %v2035
    %v2052 = vpack.c.b16 %v2038, %v2037
    %v2053 = vpack.c.b16 %v2040, %v2039
    %v2054 = vpack.c.b16 %v2042, %v2041
    %v2055 = vpack.c.b16 %v2044, %v2043
    %v2056 = vpack.c.b16 %v2046, %v2045
    %v2057 = vpack.c.b16 %v2048, %v2047
    %v2058 = vpack.c.b16 %v2050, %v2049
    %2067 = vmatpush.bf16.msra.mxu0 %v2058
    %2068 = vmatpush.bf16.msra.mxu0 %v2057
    %2069 = vmatpush.bf16.msra.mxu0 %v2056
    %2070 = vmatpush.bf16.msra.mxu0 %v2055
    %2071 = vmatpush.bf16.msra.mxu0 %v2054
    %2072 = vmatpush.bf16.msra.mxu0 %v2053
    %2073 = vmatpush.bf16.msra.mxu0 %v2052
    %2074 = vmatpush.bf16.msra.mxu0 %v2051
    %2075 = vmatmul.bf16.gmra.mxu0 %v1985
    %v2076 = vpop.f32.mrf.mxu0
    %v2077 = vadd.f32 %v2018, %v2076
    %v2078 = vpop.f32.mrf.mxu0
    %v2079 = vadd.f32 %v2018, %v2078
    %2080 = vmatmul.bf16.gmra.mxu0 %v1986
    %v2081 = vpop.f32.mrf.mxu0
    %v2082 = vadd.f32 %v2018, %v2081
    %v2083 = vpop.f32.mrf.mxu0
    %v2084 = vadd.f32 %v2018, %v2083
    %2085 = vmatmul.bf16.gmra.mxu0 %v1987
    %v2086 = vpop.f32.mrf.mxu0
    %v2087 = vadd.f32 %v2018, %v2086
    %v2088 = vpop.f32.mrf.mxu0
    %v2089 = vadd.f32 %v2018, %v2088
    %2090 = vmatmul.bf16.gmra.mxu0 %v1988
    %v2091 = vpop.f32.mrf.mxu0
    %v2092 = vadd.f32 %v2018, %v2091
    %v2093 = vpop.f32.mrf.mxu0
    %v2094 = vadd.f32 %v2018, %v2093
    %2095 = vmatmul.bf16.gmra.mxu0 %v1989
    %v2096 = vpop.f32.mrf.mxu0
    %v2097 = vadd.f32 %v2018, %v2096
    %v2098 = vpop.f32.mrf.mxu0
    %v2099 = vadd.f32 %v2018, %v2098
    %2100 = vmatmul.bf16.gmra.mxu0 %v1990
    %v2101 = vpop.f32.mrf.mxu0
    %v2102 = vadd.f32 %v2018, %v2101
    %v2103 = vpop.f32.mrf.mxu0
    %v2104 = vadd.f32 %v2018, %v2103
    %2105 = vmatmul.bf16.gmra.mxu0 %v1991
    %v2106 = vpop.f32.mrf.mxu0
    %v2107 = vadd.f32 %v2018, %v2106
    %v2108 = vpop.f32.mrf.mxu0
    %v2109 = vadd.f32 %v2018, %v2108
    %2110 = vmatmul.bf16.gmra.mxu0 %v1992
    %v2111 = vpop.f32.mrf.mxu0
    %v2112 = vadd.f32 %v2018, %v2111
    %v2113 = vpop.f32.mrf.mxu0
    %v2114 = vadd.f32 %v2018, %v2113
    %2115 = vmatmul.bf16.gmra.mxu0 %v1993
    %v2116 = vpop.f32.mrf.mxu0
    %v2117 = vadd.f32 %v2018, %v2116
    %v2118 = vpop.f32.mrf.mxu0
    %v2119 = vadd.f32 %v2018, %v2118
    %2120 = vmatmul.bf16.gmra.mxu0 %v1994
    %v2121 = vpop.f32.mrf.mxu0
    %v2122 = vadd.f32 %v2018, %v2121
    %v2123 = vpop.f32.mrf.mxu0
    %v2124 = vadd.f32 %v2018, %v2123
    %2125 = vmatmul.bf16.gmra.mxu0 %v1995
    %v2126 = vpop.f32.mrf.mxu0
    %v2127 = vadd.f32 %v2018, %v2126
    %v2128 = vpop.f32.mrf.mxu0
    %v2129 = vadd.f32 %v2018, %v2128
    %2130 = vmatmul.bf16.gmra.mxu0 %v1996
    %v2131 = vpop.f32.mrf.mxu0
    %v2132 = vadd.f32 %v2018, %v2131
    %v2133 = vpop.f32.mrf.mxu0
    %v2134 = vadd.f32 %v2018, %v2133
    %2135 = vmatmul.bf16.gmra.mxu0 %v1997
    %v2136 = vpop.f32.mrf.mxu0
    %v2137 = vadd.f32 %v2018, %v2136
    %v2138 = vpop.f32.mrf.mxu0
    %v2139 = vadd.f32 %v2018, %v2138
    %2140 = vmatmul.bf16.gmra.mxu0 %v1998
    %v2141 = vpop.f32.mrf.mxu0
    %v2142 = vadd.f32 %v2018, %v2141
    %v2143 = vpop.f32.mrf.mxu0
    %v2144 = vadd.f32 %v2018, %v2143
    %2145 = vmatmul.bf16.gmra.mxu0 %v1999
    %v2146 = vpop.f32.mrf.mxu0
    %v2147 = vadd.f32 %v2018, %v2146
    %v2148 = vpop.f32.mrf.mxu0
    %v2149 = vadd.f32 %v2018, %v2148
    %2150 = vmatmul.bf16.gmra.mxu0 %v2000
    %v2151 = vpop.f32.mrf.mxu0
    %v2152 = vadd.f32 %v2018, %v2151
    %v2153 = vpop.f32.mrf.mxu0
    %v2154 = vadd.f32 %v2018, %v2153
    %2155 = vdwg.mxu0
    %v2156 = vmax.f32 %v2077, 0.0
    %v2157 = vmax.f32 %v2079, 0.0
    %v2158 = vmax.f32 %v2082, 0.0
    %v2159 = vmax.f32 %v2084, 0.0
    %v2160 = vmax.f32 %v2087, 0.0
    %v2161 = vmax.f32 %v2089, 0.0
    %v2162 = vmax.f32 %v2092, 0.0
    %v2163 = vmax.f32 %v2094, 0.0
    %v2164 = vmax.f32 %v2097, 0.0
    %v2165 = vmax.f32 %v2099, 0.0
    %v2166 = vmax.f32 %v2102, 0.0
    %v2167 = vmax.f32 %v2104, 0.0
    %v2168 = vmax.f32 %v2107, 0.0
    %v2169 = vmax.f32 %v2109, 0.0
    %v2170 = vmax.f32 %v2112, 0.0
    %v2171 = vmax.f32 %v2114, 0.0
    %v2172 = vmax.f32 %v2117, 0.0
    %v2173 = vmax.f32 %v2119, 0.0
    %v2174 = vmax.f32 %v2122, 0.0
    %v2175 = vmax.f32 %v2124, 0.0
    %v2176 = vmax.f32 %v2127, 0.0
    %v2177 = vmax.f32 %v2129, 0.0
    %v2178 = vmax.f32 %v2132, 0.0
    %v2179 = vmax.f32 %v2134, 0.0
    %v2180 = vmax.f32 %v2137, 0.0
    %v2181 = vmax.f32 %v2139, 0.0
    %v2182 = vmax.f32 %v2142, 0.0
    %v2183 = vmax.f32 %v2144, 0.0
    %v2184 = vmax.f32 %v2147, 0.0
    %v2185 = vmax.f32 %v2149, 0.0
    %v2186 = vmax.f32 %v2152, 0.0
    %v2187 = vmax.f32 %v2154, 0.0
    %v2188 = vpack.c.bf16 %v2157, %v2156
    %v2189 = vpack.c.bf16 %v2159, %v2158
    %v2190 = vpack.c.bf16 %v2161, %v2160
    %v2191 = vpack.c.bf16 %v2163, %v2162
    %v2192 = vpack.c.bf16 %v2165, %v2164
    %v2193 = vpack.c.bf16 %v2167, %v2166
    %v2194 = vpack.c.bf16 %v2169, %v2168
    %v2195 = vpack.c.bf16 %v2171, %v2170
    %v2196 = vpack.c.bf16 %v2173, %v2172
    %v2197 = vpack.c.bf16 %v2175, %v2174
    %v2198 = vpack.c.bf16 %v2177, %v2176
    %v2199 = vpack.c.bf16 %v2179, %v2178
    %v2200 = vpack.c.bf16 %v2181, %v2180
    %v2201 = vpack.c.bf16 %v2183, %v2182
    %v2202 = vpack.c.bf16 %v2185, %v2184
    %v2203 = vpack.c.bf16 %v2187, %v2186
    %v2204 = vld [vmem:[#allocation7] sm:$0xff]
    %v2205 = vld [vmem:[#allocation7 + $0x8] sm:$0xff]
    %v2208 = vunpack.c.l.b16 %v2204
    %v2209 = vunpack.c.h.b16 %v2204
    %v2210 = vunpack.c.l.b16 %v2205
    %v2211 = vunpack.c.h.b16 %v2205
    %v2212 = vpack.c.b16 %v2210, %v2208
    %v2213 = vpack.c.b16 %v2211, %v2209
    %2216 = vmatpush.bf16.msra.mxu0 %v2195
    %2217 = vmatpush.bf16.msra.mxu0 %v2194
    %2218 = vmatpush.bf16.msra.mxu0 %v2193
    %2219 = vmatpush.bf16.msra.mxu0 %v2192
    %2220 = vmatpush.bf16.msra.mxu0 %v2191
    %2221 = vmatpush.bf16.msra.mxu0 %v2190
    %2222 = vmatpush.bf16.msra.mxu0 %v2189
    %2223 = vmatpush.bf16.msra.mxu0 %v2188
    %2224 = vmatmul.bf16.gmra.mxu0 %v2212
    %v2225 = vpop.f32.mrf.mxu0
    %v2226 = vadd.f32 0.0, %v2225
    %v2227 = vpop.f32.mrf.mxu0
    %v2228 = vadd.f32 0.0, %v2227
    %2229 = vdwg.mxu0
    %2230 = vmatpush.bf16.msra.mxu0 %v2203
    %2231 = vmatpush.bf16.msra.mxu0 %v2202
    %2232 = vmatpush.bf16.msra.mxu0 %v2201
    %2233 = vmatpush.bf16.msra.mxu0 %v2200
    %2234 = vmatpush.bf16.msra.mxu0 %v2199
    %2235 = vmatpush.bf16.msra.mxu0 %v2198
    %2236 = vmatpush.bf16.msra.mxu0 %v2197
    %2237 = vmatpush.bf16.msra.mxu0 %v2196
    %2238 = vmatmul.bf16.gmra.mxu0 %v2213
    %v2239 = vpop.f32.mrf.mxu0
    %v2240 = vadd.f32 %v2226, %v2239
    %v2241 = vpop.f32.mrf.mxu0
    %v2242 = vadd.f32 %v2228, %v2241
    %2243 = vdwg.mxu0
    %v2244 = vpack.c.bf16 %v2242, %v2240
    %s2245 = scalar_lea.vmem [#allocation8], 256
    %v2246 = vld [vmem:[%s2245] sm:$0xf]
    %v2247 = vld [vmem:[%s2245 + $0x4] sm:$0xf]
    %v2248 = vld [vmem:[%s2245 + $0x8] sm:$0xf]
    %v2249 = vld [vmem:[%s2245 + $0xc] sm:$0xf]
    %v2250 = vld [vmem:[%s2245 + $0x10] sm:$0xf]
    %v2251 = vld [vmem:[%s2245 + $0x14] sm:$0xf]
    %v2252 = vld [vmem:[%s2245 + $0x18] sm:$0xf]
    %v2253 = vld [vmem:[%s2245 + $0x1c] sm:$0xf]
    %v2254 = vld [vmem:[%s2245 + $0x20] sm:$0xf]
    %v2255 = vld [vmem:[%s2245 + $0x24] sm:$0xf]
    %v2256 = vld [vmem:[%s2245 + $0x28] sm:$0xf]
    %v2257 = vld [vmem:[%s2245 + $0x2c] sm:$0xf]
    %v2258 = vld [vmem:[%s2245 + $0x30] sm:$0xf]
    %v2259 = vld [vmem:[%s2245 + $0x34] sm:$0xf]
    %v2260 = vld [vmem:[%s2245 + $0x38] sm:$0xf]
    %v2261 = vld [vmem:[%s2245 + $0x3c] sm:$0xf]
    %v2262 = vperm.slane %v99, 1
    %v2279 = vunpack.c.l.b16 %v2246
    %v2280 = vunpack.c.l.b16 %v2247
    %v2281 = vunpack.c.l.b16 %v2248
    %v2282 = vunpack.c.l.b16 %v2249
    %v2283 = vunpack.c.l.b16 %v2250
    %v2284 = vunpack.c.l.b16 %v2251
    %v2285 = vunpack.c.l.b16 %v2252
    %v2286 = vunpack.c.l.b16 %v2253
    %v2287 = vunpack.c.l.b16 %v2254
    %v2288 = vunpack.c.l.b16 %v2255
    %v2289 = vunpack.c.l.b16 %v2256
    %v2290 = vunpack.c.l.b16 %v2257
    %v2291 = vunpack.c.l.b16 %v2258
    %v2292 = vunpack.c.l.b16 %v2259
    %v2293 = vunpack.c.l.b16 %v2260
    %v2294 = vunpack.c.l.b16 %v2261
    %v2295 = vpack.c.b16 %v2280, %v2279
    %v2296 = vpack.c.b16 %v2282, %v2281
    %v2297 = vpack.c.b16 %v2284, %v2283
    %v2298 = vpack.c.b16 %v2286, %v2285
    %v2299 = vpack.c.b16 %v2288, %v2287
    %v2300 = vpack.c.b16 %v2290, %v2289
    %v2301 = vpack.c.b16 %v2292, %v2291
    %v2302 = vpack.c.b16 %v2294, %v2293
    %2311 = vmatpush.bf16.msra.mxu0 %v2302
    %2312 = vmatpush.bf16.msra.mxu0 %v2301
    %2313 = vmatpush.bf16.msra.mxu0 %v2300
    %2314 = vmatpush.bf16.msra.mxu0 %v2299
    %2315 = vmatpush.bf16.msra.mxu0 %v2298
    %2316 = vmatpush.bf16.msra.mxu0 %v2297
    %2317 = vmatpush.bf16.msra.mxu0 %v2296
    %2318 = vmatpush.bf16.msra.mxu0 %v2295
    %2319 = vmatmul.bf16.gmra.mxu0 %v2244
    %v2320 = vpop.f32.mrf.mxu0
    %v2321 = vadd.f32 %v2262, %v2320
    %v2322 = vpop.f32.mrf.mxu0
    %v2323 = vadd.f32 %v2262, %v2322
    %2324 = vdwg.mxu0
    %v2325 = vmax.f32 %v2321, 0.0
    %v2326 = vmax.f32 %v2323, 0.0
    %v2327 = vpack.c.bf16 %v2326, %v2325
    %s2328 = scalar_lea.vmem [#allocation8], 320
    %v2329 = vld [vmem:[%s2328] sm:$0xf]
    %v2330 = vld [vmem:[%s2328 + $0x4] sm:$0xf]
    %v2331 = vld [vmem:[%s2328 + $0x8] sm:$0xf]
    %v2332 = vld [vmem:[%s2328 + $0xc] sm:$0xf]
    %v2333 = vld [vmem:[%s2328 + $0x10] sm:$0xf]
    %v2334 = vld [vmem:[%s2328 + $0x14] sm:$0xf]
    %v2335 = vld [vmem:[%s2328 + $0x18] sm:$0xf]
    %v2336 = vld [vmem:[%s2328 + $0x1c] sm:$0xf]
    %v2337 = vld [vmem:[%s2328 + $0x20] sm:$0xf]
    %v2338 = vld [vmem:[%s2328 + $0x24] sm:$0xf]
    %v2339 = vld [vmem:[%s2328 + $0x28] sm:$0xf]
    %v2340 = vld [vmem:[%s2328 + $0x2c] sm:$0xf]
    %v2341 = vld [vmem:[%s2328 + $0x30] sm:$0xf]
    %v2342 = vld [vmem:[%s2328 + $0x34] sm:$0xf]
    %v2343 = vld [vmem:[%s2328 + $0x38] sm:$0xf]
    %v2344 = vld [vmem:[%s2328 + $0x3c] sm:$0xf]
    %v2345 = vperm.slane %v99, 2
    %v2362 = vunpack.c.l.b16 %v2329
    %v2363 = vunpack.c.l.b16 %v2330
    %v2364 = vunpack.c.l.b16 %v2331
    %v2365 = vunpack.c.l.b16 %v2332
    %v2366 = vunpack.c.l.b16 %v2333
    %v2367 = vunpack.c.l.b16 %v2334
    %v2368 = vunpack.c.l.b16 %v2335
    %v2369 = vunpack.c.l.b16 %v2336
    %v2370 = vunpack.c.l.b16 %v2337
    %v2371 = vunpack.c.l.b16 %v2338
    %v2372 = vunpack.c.l.b16 %v2339
    %v2373 = vunpack.c.l.b16 %v2340
    %v2374 = vunpack.c.l.b16 %v2341
    %v2375 = vunpack.c.l.b16 %v2342
    %v2376 = vunpack.c.l.b16 %v2343
    %v2377 = vunpack.c.l.b16 %v2344
    %v2378 = vpack.c.b16 %v2363, %v2362
    %v2379 = vpack.c.b16 %v2365, %v2364
    %v2380 = vpack.c.b16 %v2367, %v2366
    %v2381 = vpack.c.b16 %v2369, %v2368
    %v2382 = vpack.c.b16 %v2371, %v2370
    %v2383 = vpack.c.b16 %v2373, %v2372
    %v2384 = vpack.c.b16 %v2375, %v2374
    %v2385 = vpack.c.b16 %v2377, %v2376
    %2394 = vmatpush.bf16.msra.mxu0 %v2385
    %2395 = vmatpush.bf16.msra.mxu0 %v2384
    %2396 = vmatpush.bf16.msra.mxu0 %v2383
    %2397 = vmatpush.bf16.msra.mxu0 %v2382
    %2398 = vmatpush.bf16.msra.mxu0 %v2381
    %2399 = vmatpush.bf16.msra.mxu0 %v2380
    %2400 = vmatpush.bf16.msra.mxu0 %v2379
    %2401 = vmatpush.bf16.msra.mxu0 %v2378
    %2402 = vmatmul.bf16.gmra.mxu0 %v2327
    %v2403 = vpop.f32.mrf.mxu0
    %v2404 = vadd.f32 %v2345, %v2403
    %v2405 = vpop.f32.mrf.mxu0
    %v2406 = vadd.f32 %v2345, %v2405
    %2407 = vdwg.mxu0
    %v2408 = vmax.f32 %v2404, 0.0
    %v2409 = vmax.f32 %v2406, 0.0
    %v2410 = vpack.c.bf16 %v2409, %v2408
    %s2411 = scalar_lea.vmem [#allocation8], 384
    %v2412 = vld [vmem:[%s2411] sm:$0xf]
    %v2413 = vld [vmem:[%s2411 + $0x4] sm:$0xf]
    %v2414 = vld [vmem:[%s2411 + $0x8] sm:$0xf]
    %v2415 = vld [vmem:[%s2411 + $0xc] sm:$0xf]
    %v2416 = vld [vmem:[%s2411 + $0x10] sm:$0xf]
    %v2417 = vld [vmem:[%s2411 + $0x14] sm:$0xf]
    %v2418 = vld [vmem:[%s2411 + $0x18] sm:$0xf]
    %v2419 = vld [vmem:[%s2411 + $0x1c] sm:$0xf]
    %v2420 = vld [vmem:[%s2411 + $0x20] sm:$0xf]
    %v2421 = vld [vmem:[%s2411 + $0x24] sm:$0xf]
    %v2422 = vld [vmem:[%s2411 + $0x28] sm:$0xf]
    %v2423 = vld [vmem:[%s2411 + $0x2c] sm:$0xf]
    %v2424 = vld [vmem:[%s2411 + $0x30] sm:$0xf]
    %v2425 = vld [vmem:[%s2411 + $0x34] sm:$0xf]
    %v2426 = vld [vmem:[%s2411 + $0x38] sm:$0xf]
    %v2427 = vld [vmem:[%s2411 + $0x3c] sm:$0xf]
    %v2428 = vperm.slane %v99, 3
    %v2445 = vunpack.c.l.b16 %v2412
    %v2446 = vunpack.c.l.b16 %v2413
    %v2447 = vunpack.c.l.b16 %v2414
    %v2448 = vunpack.c.l.b16 %v2415
    %v2449 = vunpack.c.l.b16 %v2416
    %v2450 = vunpack.c.l.b16 %v2417
    %v2451 = vunpack.c.l.b16 %v2418
    %v2452 = vunpack.c.l.b16 %v2419
    %v2453 = vunpack.c.l.b16 %v2420
    %v2454 = vunpack.c.l.b16 %v2421
    %v2455 = vunpack.c.l.b16 %v2422
    %v2456 = vunpack.c.l.b16 %v2423
    %v2457 = vunpack.c.l.b16 %v2424
    %v2458 = vunpack.c.l.b16 %v2425
    %v2459 = vunpack.c.l.b16 %v2426
    %v2460 = vunpack.c.l.b16 %v2427
    %v2461 = vpack.c.b16 %v2446, %v2445
    %v2462 = vpack.c.b16 %v2448, %v2447
    %v2463 = vpack.c.b16 %v2450, %v2449
    %v2464 = vpack.c.b16 %v2452, %v2451
    %v2465 = vpack.c.b16 %v2454, %v2453
    %v2466 = vpack.c.b16 %v2456, %v2455
    %v2467 = vpack.c.b16 %v2458, %v2457
    %v2468 = vpack.c.b16 %v2460, %v2459
    %2477 = vmatpush.bf16.msra.mxu0 %v2468
    %2478 = vmatpush.bf16.msra.mxu0 %v2467
    %2479 = vmatpush.bf16.msra.mxu0 %v2466
    %2480 = vmatpush.bf16.msra.mxu0 %v2465
    %2481 = vmatpush.bf16.msra.mxu0 %v2464
    %2482 = vmatpush.bf16.msra.mxu0 %v2463
    %2483 = vmatpush.bf16.msra.mxu0 %v2462
    %2484 = vmatpush.bf16.msra.mxu0 %v2461
    %2485 = vmatmul.bf16.gmra.mxu0 %v2410
    %v2486 = vpop.f32.mrf.mxu0
    %v2487 = vadd.f32 %v2428, %v2486
    %v2488 = vpop.f32.mrf.mxu0
    %v2489 = vadd.f32 %v2428, %v2488
    %2490 = vdwg.mxu0
    %2491 = vst [vmem:[#allocation11] sm:$0xff] %v2487
    %2492 = vst [vmem:[#allocation11 + $0x8] sm:$0xff] %v2489
    // Predicated region
    $region42: #{tpu_custom_call.1} parent=1 // pred_check
      _
    $region43: #{tpu_custom_call.1} parent=1 // pred_check_branch
      %2494 = sbr.rel (0) target = $region45
    $region44: #{tpu_custom_call.1} parent=1 // pred_region
      %2496 = vsyncadd [#allocation4], 0
      %s2497 = sshll.u32 [#allocation11], 4
      %s2498 = int_to_ptr.vmem [resolvable:$true] %s2497
      %s2499 = sshll.u32 %s5, 4
      %s2500 = int_to_ptr.hbm [resolvable:$true] %s2499
      %2505 = dma.vmem_to_hbm [thread:$0]  %s2498, 256, %s2500, [#allocation4], 128, 128, 8
    $region45: #{tpu_custom_call.1} parent=1 // pred_fallthru
      _
    // Predicated region
    $region46: #{tpu_custom_call.1} parent=1 // pred_check
      _
    $region47: #{tpu_custom_call.1} parent=1 // pred_check_branch
      %2507 = sbr.rel (0) target = $region49
    $region48: #{tpu_custom_call.1} parent=1 // pred_region
      %2509 = dma.done [#allocation4], 256
    $region49: #{tpu_custom_call.1} parent=1 // pred_fallthru
      _
    %2510 = vsyncpa [#allocation3], 1
    %2511 = vsyncpa [#allocation6], 1
    %2512 = vsyncpa [#allocation9], 1
    %2513 = vsyncpa [#allocation4], 1

</llo_original>
